<compile_context>
chip_gen: v7x
topology: tpu7x:2x2x1
jax: 0.10.0
libtpu: 0.0.40
codegen_flags: <defaults>
</compile_context>

<pallas_src>
import jax
import jax.numpy as jnp
from jax import lax
from jax.experimental import pallas as pl
from jax.experimental.pallas import tpu as pltpu


def _round_up(x, m):
    return (x + m - 1) // m * m


def _pick_tq(hw):
    for t in (128, 256, 64, 32, 16, 8):
        if hw % t == 0:
            return t
    return hw


def position_attention_kernel(x_full_ref, x_q_ref, wcat_ref, bcat_ref,
                              alpha_ref, o_ref, q_sc, k_sc, v_sc):
    # Grid: (batch, query_tile).
    #   x_full_ref : (1, HW, Cp)    full token sequence (re-fetched only per batch)
    #   x_q_ref    : (1, TQ, Cp)    query tile (residual path)
    #   wcat_ref   : (Cp, Cp+2Cr)   fused [W3 | W1 | W2]
    #   bcat_ref   : (1, Cp+2Cr)    fused [b3 | b1 | b2]
    #   alpha_ref  : (1, 1) SMEM scalar
    #   o_ref      : (1, TQ, Cp)
    # Scratch (persists across grid steps): q_sc (HW, Cr), k_sc (HW, Cr),
    # v_sc (HW, Cp).
    qt = pl.program_id(1)
    tq = o_ref.shape[1]
    cp = v_sc.shape[1]
    cr = q_sc.shape[1]

    # Fused projection for the whole sequence, once per batch element.  The
    # query-tile axis is the inner grid axis and marked "arbitrary", so this
    # runs before any other tile of the same image consumes the scratches.
    @pl.when(qt == 0)
    def _():
        qkv = jnp.dot(x_full_ref[0], wcat_ref[...],
                      preferred_element_type=jnp.float32) + bcat_ref[...]
        v_sc[...] = qkv[:, :cp]            # lane-aligned wide slice first
        q_sc[...] = qkv[:, cp:cp + cr]
        k_sc[...] = qkv[:, cp + cr:]

    row0 = pl.multiple_of(qt * tq, tq)
    q = q_sc[pl.ds(row0, tq), :]                                        # (TQ, Cr)

    # Scores: contract q/k on the channel axis directly (no explicit k.T
    # relayout feeding the MXU).
    s = lax.dot_general(q, k_sc[...],
                        dimension_numbers=(((1,), (1,)), ((), ())),
                        preferred_element_type=jnp.float32)             # (TQ, HW)

    # Row softmax over the full key axis (numerically stabilized); the divide
    # is replaced by an EUP approximate reciprocal.
    s = s - jnp.max(s, axis=-1, keepdims=True)
    p = jnp.exp(s)
    attn = p * pl.reciprocal(jnp.sum(p, axis=-1, keepdims=True), approx=True)

    ctx = jnp.dot(attn, v_sc[...], preferred_element_type=jnp.float32)  # (TQ, Cp)
    o_ref[0] = alpha_ref[0, 0] * ctx + x_q_ref[0]


def position_attention(x_nchw, w1, b1, w2, b2, w3, b3, alpha, *, tq=None):
    """x_nchw: (N, C, H, W) f32.  wi stored as (C_in, C_out); bi as (1, C_out);
    alpha as (1,) (matches nn.Parameter(torch.zeros(1)))."""
    n, c, h, w = x_nchw.shape
    hw = h * w
    cr = w1.shape[1]
    cp = _round_up(c, 128)          # lane-dense channel dim (multiple of 128)

    # NCHW -> (N, HW, C); zero-pad channels.  Padding is exact: padded weight
    # rows/cols and bias entries are zero, so padded output channels are zero
    # and are sliced off at the end.
    x_tok = jnp.transpose(x_nchw.reshape(n, c, hw), (0, 2, 1))
    xp = jnp.pad(x_tok, ((0, 0), (0, 0), (0, cp - c)))

    w1p = jnp.pad(w1, ((0, cp - c), (0, 0)))
    w2p = jnp.pad(w2, ((0, cp - c), (0, 0)))
    w3p = jnp.pad(w3, ((0, cp - c), (0, cp - c)))
    b3p = jnp.pad(b3, ((0, 0), (0, cp - c)))

    # Fused projection weight / bias, ordered [V | Q | K] so the wide V slice
    # starts on a lane boundary.
    wcat = jnp.concatenate([w3p, w1p, w2p], axis=1)          # (Cp, Cp + 2*Cr)
    bcat = jnp.concatenate([b3p, b1, b2], axis=1)            # (1,  Cp + 2*Cr)
    f = wcat.shape[1]

    if tq is None:
        tq = _pick_tq(hw)
    n_qt = hw // tq

    alpha2 = jnp.reshape(alpha, (1, 1)).astype(jnp.float32)  # SMEM scalar

    out_p = pl.pallas_call(
        position_attention_kernel,
        out_shape=jax.ShapeDtypeStruct((n, hw, cp), jnp.float32),
        grid_spec=pltpu.PrefetchScalarGridSpec(
            num_scalar_prefetch=0,
            grid=(n, n_qt),
            in_specs=[
                pl.BlockSpec((1, hw, cp), lambda b, t: (b, 0, 0)),   # x full seq
                pl.BlockSpec((1, tq, cp), lambda b, t: (b, t, 0)),   # x query tile
                pl.BlockSpec((cp, f), lambda b, t: (0, 0)),          # fused W
                pl.BlockSpec((1, f), lambda b, t: (0, 0)),           # fused bias
                pl.BlockSpec(memory_space=pltpu.MemorySpace.SMEM),   # alpha scalar
            ],
            out_specs=pl.BlockSpec((1, tq, cp), lambda b, t: (b, t, 0)),
            scratch_shapes=[
                pltpu.VMEM((hw, cr), jnp.float32),   # q (full sequence)
                pltpu.VMEM((hw, cr), jnp.float32),   # k (full sequence)
                pltpu.VMEM((hw, cp), jnp.float32),   # v (full sequence)
            ],
        ),
        compiler_params=pltpu.CompilerParams(
            # Batch axis shards across cores; query-tile axis must stay
            # sequential (scratch Q/K/V written at tile 0, read by later tiles).
            dimension_semantics=("parallel", "arbitrary"),
            # Safe on all generations (v5e default 16 MiB raised; v7x physical
            # VMEM is 64 MiB so 32 MiB scoped leaves headroom).
            vmem_limit_bytes=32 * 1024 * 1024,
        ),
    )(xp, xp, wcat, bcat, alpha2)

    out_tok = out_p[:, :, :c]
    return jnp.transpose(out_tok, (0, 2, 1)).reshape(n, c, h, w)


def position_attention_ref(x_nchw, w1, b1, w2, b2, w3, b3, alpha):
    """Pure-JAX reference mirroring the PyTorch forward."""
    n, c, h, w = x_nchw.shape
    hw = h * w
    x_tok = jnp.transpose(x_nchw.reshape(n, c, hw), (0, 2, 1))          # (n, hw, c)
    q = x_tok @ w1 + b1                                                 # (n, hw, cr)
    k = x_tok @ w2 + b2
    v = x_tok @ w3 + b3
    attn = jax.nn.softmax(jnp.einsum("nqc,nkc->nqk", q, k), axis=-1)
    ctx = jnp.einsum("nqk,nkc->nqc", attn, v)
    out_tok = alpha[0] * ctx + x_tok
    return jnp.transpose(out_tok, (0, 2, 1)).reshape(n, c, h, w)


if __name__ == "__main__":
    # Small shapes consistent with the module: channels=64, reduction=8,
    # 16x16 spatial -> HW=256 (so the query-tiling path is actually exercised
    # with 2 query tiles of 128 per image).
    N, C, H, W = 2, 64, 16, 16
    REDUCTION = 8
    CR = C // REDUCTION

    key = jax.random.PRNGKey(0)
    kx, k1, k2, k3, kb1, kb2, kb3 = jax.random.split(key, 7)

    x = jax.random.normal(kx, (N, C, H, W), dtype=jnp.float32)

    # Conv2d(c_in, c_out, 1) weights stored as (C_in, C_out) matmul weights.
    w1 = jax.random.normal(k1, (C, CR), dtype=jnp.float32) * 0.1
    w2 = jax.random.normal(k2, (C, CR), dtype=jnp.float32) * 0.1
    w3 = jax.random.normal(k3, (C, C), dtype=jnp.float32) * 0.1
    b1 = jax.random.normal(kb1, (1, CR), dtype=jnp.float32) * 0.1
    b2 = jax.random.normal(kb2, (1, CR), dtype=jnp.float32) * 0.1
    b3 = jax.random.normal(kb3, (1, C), dtype=jnp.float32) * 0.1
    # nn.Parameter(torch.zeros(1)) -> alpha starts at 0; use a nonzero value so
    # the attention path is actually exercised in the check.
    alpha = jnp.full((1,), 0.5, dtype=jnp.float32)

    out = position_attention(x, w1, b1, w2, b2, w3, b3, alpha)
    out = jax.block_until_ready(out)

    ref = position_attention_ref(x, w1, b1, w2, b2, w3, b3, alpha)
    assert out.shape == (N, C, H, W)
    # 1e-3 tolerance: softmax denominator uses the EUP approximate reciprocal;
    # all matmul accumulation stays in f32.
    assert jnp.allclose(out, ref, atol=1e-3, rtol=1e-3), \
        float(jnp.max(jnp.abs(out - ref)))

    print("KERNEL_OK")
</pallas_src>

<mosaic_0001>
module attributes {stable_mosaic.version = 11 : i64} {
  func.func @position_attention_kernel(%arg0: i32, %arg1: i32, %arg2: memref<1x256x128xf32, #tpu.memory_space<vmem>>, %arg3: memref<1x128x128xf32, #tpu.memory_space<vmem>>, %arg4: memref<128x144xf32, #tpu.memory_space<vmem>>, %arg5: memref<1x144xf32, #tpu.memory_space<vmem>>, %arg6: memref<1x1xf32, #tpu.memory_space<smem>>, %arg7: memref<1x128x128xf32, #tpu.memory_space<vmem>>, %arg8: memref<256x8xf32, #tpu.memory_space<vmem>>, %arg9: memref<256x8xf32, #tpu.memory_space<vmem>>, %arg10: memref<256x128xf32, #tpu.memory_space<vmem>>) attributes {dimension_semantics = [#tpu.dimension_semantics<parallel>, #tpu.dimension_semantics<arbitrary>], iteration_bounds = array<i64: 2, 2>, scalar_prefetch = 0 : i64, scratch_operands = 3 : i64, tpu.core_type = #tpu.core_type<tc>, window_params = [{transform_indices = @transform_0, window_bounds = array<i64: 1, 256, 128>}, {transform_indices = @transform_1, window_bounds = array<i64: 1, 128, 128>}, {pipeline_mode = #tpu.pipeline_mode<synchronous>, transform_indices = @transform_2, window_bounds = array<i64: 128, 144>}, {pipeline_mode = #tpu.pipeline_mode<synchronous>, transform_indices = @transform_3, window_bounds = array<i64: 1, 144>}, {transform_indices = @transform_4, window_bounds = array<i64: 1, 1>}, {transform_indices = @transform_5, window_bounds = array<i64: 1, 128, 128>}]} {
    %c0_i32 = arith.constant 0 : i32
    %0 = arith.cmpi eq, %arg1, %c0_i32 : i32
    %1 = arith.extui %0 : i1 to i32
    %c0_i32_0 = arith.constant 0 : i32
    %2 = arith.cmpi ne, %1, %c0_i32_0 : i32
    scf.if %2 {
      %c0_16 = arith.constant 0 : index
      %c0_17 = arith.constant 0 : index
      %c0_18 = arith.constant 0 : index
      %30 = vector.load %arg2[%c0_16, %c0_17, %c0_18] : memref<1x256x128xf32, #tpu.memory_space<vmem>>, vector<1x256x128xf32>
      %31 = vector.shape_cast %30 : vector<1x256x128xf32> to vector<256x128xf32>
      %c0_19 = arith.constant 0 : index
      %c0_20 = arith.constant 0 : index
      %32 = vector.load %arg4[%c0_19, %c0_20] : memref<128x144xf32, #tpu.memory_space<vmem>>, vector<128x144xf32>
      %cst_21 = arith.constant dense<0.000000e+00> : vector<256x144xf32>
      %33 = tpu.matmul %31, %32, %cst_21 {dimension_numbers = #tpu.dot_dimension_numbers<[1], [0], [0], [1], [0, 0, 1, 1], [], []>} : vector<256x128xf32>, vector<128x144xf32>, vector<256x144xf32> -> vector<256x144xf32>
      %c0_22 = arith.constant 0 : index
      %c0_23 = arith.constant 0 : index
      %34 = vector.load %arg5[%c0_22, %c0_23] : memref<1x144xf32, #tpu.memory_space<vmem>>, vector<1x144xf32>
      %35 = vector.broadcast %34 : vector<1x144xf32> to vector<256x144xf32>
      %36 = arith.addf %33, %35 : vector<256x144xf32>
      %37 = vector.extract_strided_slice %36 {offsets = [0, 0], sizes = [256, 128], strides = [1, 1]} : vector<256x144xf32> to vector<256x128xf32>
      %c0_24 = arith.constant 0 : index
      %c0_25 = arith.constant 0 : index
      %38 = vector.load %arg10[%c0_24, %c0_25] : memref<256x128xf32, #tpu.memory_space<vmem>>, vector<256x128xf32>
      tpu.vector_store %arg10[%c0_24, %c0_25], %37 {strides = array<i32>} : memref<256x128xf32, #tpu.memory_space<vmem>>, vector<256x128xf32>,
      %39 = vector.extract_strided_slice %36 {offsets = [0, 128], sizes = [256, 8], strides = [1, 1]} : vector<256x144xf32> to vector<256x8xf32>
      %c0_26 = arith.constant 0 : index
      %c0_27 = arith.constant 0 : index
      %40 = vector.load %arg8[%c0_26, %c0_27] : memref<256x8xf32, #tpu.memory_space<vmem>>, vector<256x8xf32>
      tpu.vector_store %arg8[%c0_26, %c0_27], %39 {strides = array<i32>} : memref<256x8xf32, #tpu.memory_space<vmem>>, vector<256x8xf32>,
      %41 = vector.extract_strided_slice %36 {offsets = [0, 136], sizes = [256, 8], strides = [1, 1]} : vector<256x144xf32> to vector<256x8xf32>
      %c0_28 = arith.constant 0 : index
      %c0_29 = arith.constant 0 : index
      %42 = vector.load %arg9[%c0_28, %c0_29] : memref<256x8xf32, #tpu.memory_space<vmem>>, vector<256x8xf32>
      tpu.vector_store %arg9[%c0_28, %c0_29], %41 {strides = array<i32>} : memref<256x8xf32, #tpu.memory_space<vmem>>, vector<256x8xf32>,
    } else {
    }
    %c128_i32 = arith.constant 128 : i32
    %3 = arith.muli %arg1, %c128_i32 : i32
    %4 = tpu.assume_multiple %3, 128 : i32
    %5 = arith.index_cast %4 : i32 to index
    %c0 = arith.constant 0 : index
    %6 = vector.load %arg8[%5, %c0] : memref<256x8xf32, #tpu.memory_space<vmem>>, vector<128x8xf32>
    %c0_1 = arith.constant 0 : index
    %c0_2 = arith.constant 0 : index
    %7 = vector.load %arg9[%c0_1, %c0_2] : memref<256x8xf32, #tpu.memory_space<vmem>>, vector<256x8xf32>
    %cst = arith.constant dense<0.000000e+00> : vector<128x256xf32>
    %8 = tpu.matmul %6, %7, %cst {dimension_numbers = #tpu.dot_dimension_numbers<[1], [1], [0], [0], [0, 0, 1, 0], [], []>} : vector<128x8xf32>, vector<256x8xf32>, vector<128x256xf32> -> vector<128x256xf32>
    %cst_3 = arith.constant dense<0xFF800000> : vector<128xf32>
    %9 = vector.multi_reduction <maximumf>, %8, %cst_3 [1] : vector<128x256xf32> to vector<128xf32>
    %10 = vector.shape_cast %9 : vector<128xf32> to vector<128x1xf32>
    %11 = vector.broadcast %10 : vector<128x1xf32> to vector<128x256xf32>
    %12 = arith.subf %8, %11 : vector<128x256xf32>
    %13 = math.exp %12 : vector<128x256xf32>
    %cst_4 = arith.constant dense<0.000000e+00> : vector<128xf32>
    %14 = vector.multi_reduction <add>, %13, %cst_4 [1] : vector<128x256xf32> to vector<128xf32>
    %15 = vector.shape_cast %14 : vector<128xf32> to vector<128x1xf32>
    %16 = tpu.reciprocal %15 {approx = true} : vector<128x1xf32> -> vector<128x1xf32>
    %17 = vector.broadcast %16 : vector<128x1xf32> to vector<128x256xf32>
    %18 = arith.mulf %13, %17 : vector<128x256xf32>
    %c0_5 = arith.constant 0 : index
    %c0_6 = arith.constant 0 : index
    %19 = vector.load %arg10[%c0_5, %c0_6] : memref<256x128xf32, #tpu.memory_space<vmem>>, vector<256x128xf32>
    %cst_7 = arith.constant dense<0.000000e+00> : vector<128x128xf32>
    %20 = tpu.matmul %18, %19, %cst_7 {dimension_numbers = #tpu.dot_dimension_numbers<[1], [0], [0], [1], [0, 0, 1, 1], [], []>} : vector<128x256xf32>, vector<256x128xf32>, vector<128x128xf32> -> vector<128x128xf32>
    %c0_8 = arith.constant 0 : index
    %c0_9 = arith.constant 0 : index
    %21 = memref.load %arg6[%c0_8, %c0_9] : memref<1x1xf32, #tpu.memory_space<smem>>
    %22 = vector.broadcast %21 : f32 to vector<128x128xf32>
    %23 = arith.mulf %22, %20 : vector<128x128xf32>
    %c0_10 = arith.constant 0 : index
    %c0_11 = arith.constant 0 : index
    %c0_12 = arith.constant 0 : index
    %24 = vector.load %arg3[%c0_10, %c0_11, %c0_12] : memref<1x128x128xf32, #tpu.memory_space<vmem>>, vector<1x128x128xf32>
    %25 = vector.shape_cast %24 : vector<1x128x128xf32> to vector<128x128xf32>
    %26 = arith.addf %23, %25 : vector<128x128xf32>
    %c0_13 = arith.constant 0 : index
    %c0_14 = arith.constant 0 : index
    %c0_15 = arith.constant 0 : index
    %27 = vector.load %arg7[%c0_13, %c0_14, %c0_15] : memref<1x128x128xf32, #tpu.memory_space<vmem>>, vector<1x128x128xf32>
    %28 = vector.shape_cast %27 : vector<1x128x128xf32> to vector<128x128xf32>
    %29 = vector.shape_cast %26 : vector<128x128xf32> to vector<1x128x128xf32>
    tpu.vector_store %arg7[%c0_13, %c0_14, %c0_15], %29 {strides = array<i32>} : memref<1x128x128xf32, #tpu.memory_space<vmem>>, vector<1x128x128xf32>,
    return
  }
  func.func @transform_0(%arg0: i32, %arg1: i32) -> (i32, i32, i32) {
    %c0_i32 = arith.constant 0 : i32
    %c0_i32_0 = arith.constant 0 : i32
    %c0_i32_1 = arith.constant 0 : i32
    return %arg0, %c0_i32, %c0_i32_0 : i32, i32, i32
  }
  func.func @transform_1(%arg0: i32, %arg1: i32) -> (i32, i32, i32) {
    %c0_i32 = arith.constant 0 : i32
    %c0_i32_0 = arith.constant 0 : i32
    return %arg0, %arg1, %c0_i32 : i32, i32, i32
  }
  func.func @transform_2(%arg0: i32, %arg1: i32) -> (i32, i32) {
    %c0_i32 = arith.constant 0 : i32
    %c0_i32_0 = arith.constant 0 : i32
    %c0_i32_1 = arith.constant 0 : i32
    return %c0_i32, %c0_i32_0 : i32, i32
  }
  func.func @transform_3(%arg0: i32, %arg1: i32) -> (i32, i32) {
    %c0_i32 = arith.constant 0 : i32
    %c0_i32_0 = arith.constant 0 : i32
    %c0_i32_1 = arith.constant 0 : i32
    return %c0_i32, %c0_i32_0 : i32, i32
  }
  func.func @transform_4(%arg0: i32, %arg1: i32) -> (i32, i32) {
    %c0_i32 = arith.constant 0 : i32
    %c0_i32_0 = arith.constant 0 : i32
    %c0_i32_1 = arith.constant 0 : i32
    return %c0_i32, %c0_i32_0 : i32, i32
  }
  func.func @transform_5(%arg0: i32, %arg1: i32) -> (i32, i32, i32) {
    %c0_i32 = arith.constant 0 : i32
    %c0_i32_0 = arith.constant 0 : i32
    return %arg0, %arg1, %c0_i32 : i32, i32, i32
  }
}

</mosaic_0001>

<llo_original>
// kernel: tpu_custom_call.1
$region0: #{tpu_custom_call.1}
  #allocation0 [shape = 'u32[]', space=smem, size = 0x4, offset = 0x4, fixed_abs, tag = 'smem constant byte address 0x4 - core index']
  #allocation1 [shape = 'u32[144,128]{1,0:T(1,128)}', space=vmem, size = 0x12000, scoped, tag = 'internal scratch']
  #allocation2 [shape = 'f32[256,8]{1,0:T(8,128)}', space=vmem, size = 0x20000, scoped, tag = 'scratch operand']
  #allocation3 [shape = 'f32[256,8]{1,0:T(8,128)}', space=vmem, size = 0x20000, scoped, tag = 'scratch operand']
  #allocation4 [shape = 'f32[256,128]{1,0:T(8,128)}', space=vmem, size = 0x20000, scoped, tag = 'scratch operand']
  #allocation5 [shape = 'f32[1,1]{1,0:T(1,128)S(6)}', space=smem, size = 0x200, scoped, tag = 'scoped memory for tpu_custom_call.1']
  %s0 = inlined_call_operand.hbm [shape: f32[2,256,128], index: 0, kind: input, shape index: {}]
  %s1 = inlined_call_operand.hbm [shape: f32[2,256,128], index: 1, kind: input, shape index: {}]
  %s2 = inlined_call_operand.vmem [shape: f32[128,144], index: 2, kind: input, shape index: {}]
  %s3 = inlined_call_operand.vmem [shape: f32[1,144], index: 3, kind: input, shape index: {}]
  %s4 = inlined_call_operand.<no memory space> [shape: f32[1,1], index: 4, kind: input, shape index: {}]
  %s5 = inlined_call_operand.hbm [shape: f32[2,256,128], index: 5, kind: output, shape index: {}]
  %s6 = sld [smem:[#allocation0]]
  $region65: #{tpu_custom_call.1} parent=0
    _
  %s8 = ssub.s32 1, %s6
  %s9 = scalar_select 0, %s8, %s6
  %10 = sst [smem:[#allocation5]] %s4
  $region1: #{tpu_custom_call.1} parent=0
    #allocation6 [shape = 'u8[262144]{0}', space=vmem, size = 0x40000, scoped, tag = 'input window, operand 0']
    #allocation7 [shape = 's32[2]{0}', space=sflag, size = 0x8, scoped, tag = 'scoped memory for tpu_custom_call.1']
    #allocation8 [shape = 's32[2]{0}', space=sflag, size = 0x8, scoped, tag = 'scoped memory for tpu_custom_call.1']
    #allocation9 [shape = 'u8[131072]{0}', space=vmem, size = 0x20000, scoped, tag = 'input window, operand 1']
    #allocation10 [shape = 's32[2]{0}', space=sflag, size = 0x8, scoped, tag = 'scoped memory for tpu_custom_call.1']
    #allocation11 [shape = 'u8[131072]{0}', space=vmem, size = 0x20000, scoped, tag = 'output window, operand 0']
    %11 = vsyncpa [#allocation7], 0
    %s12 = scalar_lea.sflag [#allocation7], 1
    %13 = vsyncpa %s12, 0
    %14 = vsyncpa [#allocation10], 0
    %s15 = scalar_lea.sflag [#allocation10], 1
    %16 = vsyncpa %s15, 0
    %17 = vsyncpa [#allocation8], 0
    %s18 = scalar_lea.sflag [#allocation8], 1
    %19 = vsyncpa %s18, 0
    loop: start=0, step=1, limit=6
    $region2: #{tpu_custom_call.1} parent=1 // loop_pre_header
      _
    $region3: #{tpu_custom_call.1} parent=1 // loop_header
      %s21 = sphi 0, %s25
      %p22 = scmp.ge.s32.totalorder %s21, 6
      %s28 = sphi 0, %s40
      %s29 = sphi 0, %s36
      %s30 = sphi 0, %s28
      %s31 = sphi 0, %s29
      %s32 = sphi 0, %s30
      %s33 = sphi 0, %s31
      %s43 = sphi 0, %s45
      %s46 = sphi 0, %s43
      %s47 = sphi 0, %s46
      %s63 = sphi 0, %s47
      %s71 = sphi 0, %s73
      %s74 = sphi 0, %s71
      %s75 = sphi 0, %s74
      %s91 = sphi 0, %s75
      %s95 = sphi 0, %s95
      %s97 = sphi 0, %s95
      %s98 = sphi 0, %s97
      %s112 = sphi 0, %s98
      %s116 = sphi 0, %s116
      %s118 = sphi 0, %s116
      %s119 = sphi 0, %s118
      %s133 = sphi 0, %s119
      %s137 = sphi 0, %s137
      %s139 = sphi 0, %s137
      %s140 = sphi 0, %s139
      %s154 = sphi 0, %s140
      %s162 = sphi 0, %s164
      %s165 = sphi 0, %s162
      %s166 = sphi 0, %s165
      %s182 = sphi 0, %s166
    $region4: #{tpu_custom_call.1} parent=1 // loop_header_branch
      %24 = sbr.rel (%p22) target = $region8
    $region5: #{tpu_custom_call.1} parent=1 // loop_body
      %s26 = ssub.s32 %s21, 1
      %s27 = ssub.s32 %s21, 2
      %s34 = sadd.s32 1, %s29
      %p35 = scmp.ge.s32.totalorder %s34, 2
      %s36 = scalar_select %p35, 0, %s34
      %s37 = sadd.s32 1, %s28
      %s38 = scalar_select %p35, %s37, %s28
      %p39 = scmp.ge.s32.totalorder %s38, 2
      %s40 = scalar_select %p39, 0, %s38
      %s41 = ssub.s32 %s28, %s40
      %p42 = scmp.eq.s32.totalorder %s41, 0
      %s44 = sadd.s32 %s43, 1
      %s45 = scalar_select %p42, %s43, %s44
      %p48 = pneg %p42
      %p49 = scmp.eq.s32.totalorder %s21, 3
      %p50 = por %p48, %p49
      %p51 = scmp.ne.s32.totalorder %s43, %s46
      %p52 = scmp.eq.s32.totalorder %s21, 0
      %p53 = por %p51, %p52
      %p54 = scmp.ne.s32.totalorder %s43, %s46
      %p55 = scmp.eq.s32.totalorder %s26, 3
      %p56 = por %p54, %p55
      %p57 = scmp.ne.s32.totalorder %s46, %s47
      %p58 = scmp.eq.s32.totalorder %s26, 0
      %p59 = por %p57, %p58
      %p60 = scmp.ne.s32.totalorder %s46, %s47
      %p61 = scmp.eq.s32.totalorder %s27, 3
      %p62 = por %p60, %p61
      %p64 = scmp.ne.s32.totalorder %s47, %s63
      %p65 = scmp.eq.s32.totalorder %s27, 0
      %p66 = por %p64, %p65
      %s67 = ssub.s32 %s28, %s40
      %s68 = ssub.s32 %s29, %s36
      %s69 = sor.u32 %s67, %s68
      %p70 = scmp.eq.s32.totalorder %s69, 0
      %s72 = sadd.s32 %s71, 1
      %s73 = scalar_select %p70, %s71, %s72
      %p76 = pneg %p70
      %p77 = scmp.eq.s32.totalorder %s21, 3
      %p78 = por %p76, %p77
      %p79 = scmp.ne.s32.totalorder %s71, %s74
      %p80 = scmp.eq.s32.totalorder %s21, 0
      %p81 = por %p79, %p80
      %p82 = scmp.ne.s32.totalorder %s71, %s74
      %p83 = scmp.eq.s32.totalorder %s26, 3
      %p84 = por %p82, %p83
      %p85 = scmp.ne.s32.totalorder %s74, %s75
      %p86 = scmp.eq.s32.totalorder %s26, 0
      %p87 = por %p85, %p86
      %p88 = scmp.ne.s32.totalorder %s74, %s75
      %p89 = scmp.eq.s32.totalorder %s27, 3
      %p90 = por %p88, %p89
      %p92 = scmp.ne.s32.totalorder %s75, %s91
      %p93 = scmp.eq.s32.totalorder %s27, 0
      %p94 = por %p92, %p93
      %s96 = sadd.s32 %s95, 1
      %p99 = scmp.eq.s32.totalorder %s21, 3
      %p100 = scmp.ne.s32.totalorder %s95, %s97
      %p101 = scmp.eq.s32.totalorder %s21, 0
      %p102 = por %p100, %p101
      %p103 = scmp.ne.s32.totalorder %s95, %s97
      %p104 = scmp.eq.s32.totalorder %s26, 3
      %p105 = por %p103, %p104
      %p106 = scmp.ne.s32.totalorder %s97, %s98
      %p107 = scmp.eq.s32.totalorder %s26, 0
      %p108 = por %p106, %p107
      %p109 = scmp.ne.s32.totalorder %s97, %s98
      %p110 = scmp.eq.s32.totalorder %s27, 3
      %p111 = por %p109, %p110
      %p113 = scmp.ne.s32.totalorder %s98, %s112
      %p114 = scmp.eq.s32.totalorder %s27, 0
      %p115 = por %p113, %p114
      %s117 = sadd.s32 %s116, 1
      %p120 = scmp.eq.s32.totalorder %s21, 3
      %p121 = scmp.ne.s32.totalorder %s116, %s118
      %p122 = scmp.eq.s32.totalorder %s21, 0
      %p123 = por %p121, %p122
      %p124 = scmp.ne.s32.totalorder %s116, %s118
      %p125 = scmp.eq.s32.totalorder %s26, 3
      %p126 = por %p124, %p125
      %p127 = scmp.ne.s32.totalorder %s118, %s119
      %p128 = scmp.eq.s32.totalorder %s26, 0
      %p129 = por %p127, %p128
      %p130 = scmp.ne.s32.totalorder %s118, %s119
      %p131 = scmp.eq.s32.totalorder %s27, 3
      %p132 = por %p130, %p131
      %p134 = scmp.ne.s32.totalorder %s119, %s133
      %p135 = scmp.eq.s32.totalorder %s27, 0
      %p136 = por %p134, %p135
      %s138 = sadd.s32 %s137, 1
      %p141 = scmp.eq.s32.totalorder %s21, 3
      %p142 = scmp.ne.s32.totalorder %s137, %s139
      %p143 = scmp.eq.s32.totalorder %s21, 0
      %p144 = por %p142, %p143
      %p145 = scmp.ne.s32.totalorder %s137, %s139
      %p146 = scmp.eq.s32.totalorder %s26, 3
      %p147 = por %p145, %p146
      %p148 = scmp.ne.s32.totalorder %s139, %s140
      %p149 = scmp.eq.s32.totalorder %s26, 0
      %p150 = por %p148, %p149
      %p151 = scmp.ne.s32.totalorder %s139, %s140
      %p152 = scmp.eq.s32.totalorder %s27, 3
      %p153 = por %p151, %p152
      %p155 = scmp.ne.s32.totalorder %s140, %s154
      %p156 = scmp.eq.s32.totalorder %s27, 0
      %p157 = por %p155, %p156
      %s158 = ssub.s32 %s28, %s40
      %s159 = ssub.s32 %s29, %s36
      %s160 = sor.u32 %s158, %s159
      %p161 = scmp.eq.s32.totalorder %s160, 0
      %s163 = sadd.s32 %s162, 1
      %s164 = scalar_select %p161, %s162, %s163
      %p167 = pneg %p161
      %p168 = scmp.eq.s32.totalorder %s21, 3
      %p169 = por %p167, %p168
      %p170 = scmp.ne.s32.totalorder %s162, %s165
      %p171 = scmp.eq.s32.totalorder %s21, 0
      %p172 = por %p170, %p171
      %p173 = scmp.ne.s32.totalorder %s162, %s165
      %p174 = scmp.eq.s32.totalorder %s26, 3
      %p175 = por %p173, %p174
      %p176 = scmp.ne.s32.totalorder %s165, %s166
      %p177 = scmp.eq.s32.totalorder %s26, 0
      %p178 = por %p176, %p177
      %p179 = scmp.ne.s32.totalorder %s165, %s166
      %p180 = scmp.eq.s32.totalorder %s27, 3
      %p181 = por %p179, %p180
      %p183 = scmp.ne.s32.totalorder %s166, %s182
      %p184 = scmp.eq.s32.totalorder %s27, 0
      %p185 = por %p183, %p184
      %p186 = scmp.le.s32.totalorder 1, %s21
      %p187 = scmp.lt.s32.totalorder %s21, 5
      %p188 = pnand %p186, %p187
      %p189 = pneg %p188
      // Predicated region
      $region9: #{tpu_custom_call.1} parent=5 // pred_check
        _
      $region10: #{tpu_custom_call.1} parent=5 // pred_check_branch
        %191 = sbr.rel (%p188) target = $region12
      $region11: #{tpu_custom_call.1} parent=5 // pred_region
        %s192 = ssub.s32 %s21, 1
        // Predicated region
        $region13: #{tpu_custom_call.1} parent=11 // pred_check
          %p193 = pneg %p108
        $region14: #{tpu_custom_call.1} parent=11 // pred_check_branch
          %195 = sbr.rel (%p193) target = $region16
        $region15: #{tpu_custom_call.1} parent=11 // pred_region
          _
        $region16: #{tpu_custom_call.1} parent=11 // pred_fallthru
          _
        // Predicated region
        $region17: #{tpu_custom_call.1} parent=11 // pred_check
          %p196 = pneg %p129
        $region18: #{tpu_custom_call.1} parent=11 // pred_check_branch
          %198 = sbr.rel (%p196) target = $region20
        $region19: #{tpu_custom_call.1} parent=11 // pred_region
          _
        $region20: #{tpu_custom_call.1} parent=11 // pred_fallthru
          _
        // Predicated region
        $region21: #{tpu_custom_call.1} parent=11 // pred_check
          %p199 = pneg %p150
        $region22: #{tpu_custom_call.1} parent=11 // pred_check_branch
          %201 = sbr.rel (%p199) target = $region24
        $region23: #{tpu_custom_call.1} parent=11 // pred_region
          _
        $region24: #{tpu_custom_call.1} parent=11 // pred_fallthru
          _
      $region12: #{tpu_custom_call.1} parent=5 // pred_fallthru
        _
      %p202 = scmp.lt.s32.totalorder %s21, 4
      // Predicated region
      $region25: #{tpu_custom_call.1} parent=5 // pred_check
        %p203 = pneg %p202
      $region26: #{tpu_custom_call.1} parent=5 // pred_check_branch
        %205 = sbr.rel (%p203) target = $region28
      $region27: #{tpu_custom_call.1} parent=5 // pred_region
        // Predicated region
        $region29: #{tpu_custom_call.1} parent=27 // pred_check
          %p206 = pneg %p53
        $region30: #{tpu_custom_call.1} parent=27 // pred_check_branch
          %208 = sbr.rel (%p206) target = $region32
        $region31: #{tpu_custom_call.1} parent=27 // pred_region
          %s209 = sand.u32 %s43, 1
          %s210 = scalar_lea.sflag [#allocation7], %s209
          %s211 = sand.u32 %s43, 1
          %s212 = smul.addr %s211, 256
          %s213 = scalar_lea.vmem [#allocation6], %s212
          %s215 = ssub.s32 4096, 4096
          %216 = vsyncadd %s210, %s215
          %s217 = smul.addr %s28, 32
          %s218 = smul.addr %s217, 128
          %s219 = scalar_lea.hbm %s0, %s218
          %s220 = sshll.u32 %s213, 4
          %s221 = int_to_ptr.vmem [resolvable:$true] %s220
          %226 = dma.hbm_to_vmem [thread:$0]  %s219, 4096, %s221, %s210, 128, 128, 8
        $region32: #{tpu_custom_call.1} parent=27 // pred_fallthru
          _
        // Predicated region
        $region33: #{tpu_custom_call.1} parent=27 // pred_check
          %p227 = pneg %p81
        $region34: #{tpu_custom_call.1} parent=27 // pred_check_branch
          %229 = sbr.rel (%p227) target = $region36
        $region35: #{tpu_custom_call.1} parent=27 // pred_region
          %s230 = sand.u32 %s71, 1
          %s231 = scalar_lea.sflag [#allocation10], %s230
          %s232 = sand.u32 %s71, 1
          %s233 = smul.addr %s232, 128
          %s234 = scalar_lea.vmem [#allocation9], %s233
          %s235 = smul.u32 16, %s29
          %s237 = ssub.s32 2048, 2048
          %238 = vsyncadd %s231, %s237
          %s239 = smul.addr %s28, 32
          %s240 = sadd.s32 %s235, %s239
          %s241 = smul.addr %s240, 128
          %s242 = scalar_lea.hbm %s1, %s241
          %s243 = sshll.u32 %s234, 4
          %s244 = int_to_ptr.vmem [resolvable:$true] %s243
          %249 = dma.hbm_to_vmem [thread:$0]  %s242, 2048, %s244, %s231, 128, 128, 8
        $region36: #{tpu_custom_call.1} parent=27 // pred_fallthru
          _
      $region28: #{tpu_custom_call.1} parent=5 // pred_fallthru
        _
      %p250 = scmp.le.s32.totalorder 1, %s21
      %p251 = scmp.lt.s32.totalorder %s21, 5
      %p252 = pnand %p250, %p251
      %p253 = pneg %p252
      // Predicated region
      $region37: #{tpu_custom_call.1} parent=5 // pred_check
        _
      $region38: #{tpu_custom_call.1} parent=5 // pred_check_branch
        %255 = sbr.rel (%p252) target = $region40
      $region39: #{tpu_custom_call.1} parent=5 // pred_region
        %s256 = ssub.s32 %s21, 1
        %s257 = sand.u32 %s46, 1
        %s258 = scalar_lea.sflag [#allocation7], %s257
        %s259 = sand.u32 %s46, 1
        %s260 = smul.addr %s259, 256
        %s261 = scalar_lea.vmem [#allocation6], %s260
        // Predicated region
        $region41: #{tpu_custom_call.1} parent=39 // pred_check
          %p262 = pneg %p59
        $region42: #{tpu_custom_call.1} parent=39 // pred_check_branch
          %264 = sbr.rel (%p262) target = $region44
        $region43: #{tpu_custom_call.1} parent=39 // pred_region
          %265 = dma.done %s258, 4096
        $region44: #{tpu_custom_call.1} parent=39 // pred_fallthru
          _
        %s266 = sand.u32 %s74, 1
        %s267 = scalar_lea.sflag [#allocation10], %s266
        %s268 = sand.u32 %s74, 1
        %s269 = smul.addr %s268, 128
        %s270 = scalar_lea.vmem [#allocation9], %s269
        // Predicated region
        $region45: #{tpu_custom_call.1} parent=39 // pred_check
          %p271 = pneg %p87
        $region46: #{tpu_custom_call.1} parent=39 // pred_check_branch
          %273 = sbr.rel (%p271) target = $region48
        $region47: #{tpu_custom_call.1} parent=39 // pred_region
          %274 = dma.done %s267, 2048
        $region48: #{tpu_custom_call.1} parent=39 // pred_fallthru
          _
        %s275 = sand.u32 %s46, 1
        %s276 = scalar_lea.sflag [#allocation7], %s275
        %s277 = sand.u32 %s46, 1
        %s278 = smul.addr %s277, 256
        %s279 = scalar_lea.vmem [#allocation6], %s278
        %p280 = pneg %p59
        %p281 = pneg %p56
        %s282 = sand.u32 %s74, 1
        %s283 = scalar_lea.sflag [#allocation10], %s282
        %s284 = sand.u32 %s74, 1
        %s285 = smul.addr %s284, 128
        %s286 = scalar_lea.vmem [#allocation9], %s285
        %p287 = pneg %p87
        %p288 = pneg %p84
        %p289 = pneg %p108
        %p290 = pneg %p105
        %p291 = pneg %p129
        %p292 = pneg %p126
        %p293 = pneg %p150
        %p294 = pneg %p147
        %p295 = pneg %p178
        %p296 = pneg %p175
        %s297 = sand.u32 %s165, 1
        %s298 = scalar_lea.sflag [#allocation8], %s297
        %s299 = sand.u32 %s165, 1
        %s300 = smul.addr %s299, 128
        %s301 = scalar_lea.vmem [#allocation11], %s300
        %s302 = smul.u32 16, %s31
        %s303 = smul.u32 16, %s31
        %p304 = scmp.eq.s32.totalorder %s31, 0
        // Predicated region
        $region49: #{tpu_custom_call.1} parent=39 // pred_check
          %p305 = pneg %p304
        $region50: #{tpu_custom_call.1} parent=39 // pred_check_branch
          %307 = sbr.rel (%p305) target = $region52
        $region51: #{tpu_custom_call.1} parent=39 // pred_region
          %v308 = vld [vmem:[%s261] sm:$0xff]
          %v309 = vld [vmem:[%s261 + $0x8] sm:$0xff]
          %v310 = vld [vmem:[%s261 + $0x10] sm:$0xff]
          %v311 = vld [vmem:[%s261 + $0x18] sm:$0xff]
          %v312 = vld [vmem:[%s261 + $0x20] sm:$0xff]
          %v313 = vld [vmem:[%s261 + $0x28] sm:$0xff]
          %v314 = vld [vmem:[%s261 + $0x30] sm:$0xff]
          %v315 = vld [vmem:[%s261 + $0x38] sm:$0xff]
          %v316 = vld [vmem:[%s261 + $0x40] sm:$0xff]
          %v317 = vld [vmem:[%s261 + $0x48] sm:$0xff]
          %v318 = vld [vmem:[%s261 + $0x50] sm:$0xff]
          %v319 = vld [vmem:[%s261 + $0x58] sm:$0xff]
          %v320 = vld [vmem:[%s261 + $0x60] sm:$0xff]
          %v321 = vld [vmem:[%s261 + $0x68] sm:$0xff]
          %v322 = vld [vmem:[%s261 + $0x70] sm:$0xff]
          %v323 = vld [vmem:[%s261 + $0x78] sm:$0xff]
          %v324 = vld [vmem:[%s261 + $0x80] sm:$0xff]
          %v325 = vld [vmem:[%s261 + $0x88] sm:$0xff]
          %v326 = vld [vmem:[%s261 + $0x90] sm:$0xff]
          %v327 = vld [vmem:[%s261 + $0x98] sm:$0xff]
          %v328 = vld [vmem:[%s261 + $0xa0] sm:$0xff]
          %v329 = vld [vmem:[%s261 + $0xa8] sm:$0xff]
          %v330 = vld [vmem:[%s261 + $0xb0] sm:$0xff]
          %v331 = vld [vmem:[%s261 + $0xb8] sm:$0xff]
          %v332 = vld [vmem:[%s261 + $0xc0] sm:$0xff]
          %v333 = vld [vmem:[%s261 + $0xc8] sm:$0xff]
          %v334 = vld [vmem:[%s261 + $0xd0] sm:$0xff]
          %v335 = vld [vmem:[%s261 + $0xd8] sm:$0xff]
          %v336 = vld [vmem:[%s261 + $0xe0] sm:$0xff]
          %v337 = vld [vmem:[%s261 + $0xe8] sm:$0xff]
          %v338 = vld [vmem:[%s261 + $0xf0] sm:$0xff]
          %v339 = vld [vmem:[%s261 + $0xf8] sm:$0xff]
          %v340 = vld [vmem:[%s2] sm:$0xff]
          %v341 = vld [vmem:[%s2 + $0x8] sm:$0xff]
          %v342 = vld [vmem:[%s2 + $0x10] sm:$0xff]
          %v343 = vld [vmem:[%s2 + $0x18] sm:$0xff]
          %v344 = vld [vmem:[%s2 + $0x20] sm:$0xff]
          %v345 = vld [vmem:[%s2 + $0x28] sm:$0xff]
          %v346 = vld [vmem:[%s2 + $0x30] sm:$0xff]
          %v347 = vld [vmem:[%s2 + $0x38] sm:$0xff]
          %v348 = vld [vmem:[%s2 + $0x40] sm:$0xff]
          %v349 = vld [vmem:[%s2 + $0x48] sm:$0xff]
          %v350 = vld [vmem:[%s2 + $0x50] sm:$0xff]
          %v351 = vld [vmem:[%s2 + $0x58] sm:$0xff]
          %v352 = vld [vmem:[%s2 + $0x60] sm:$0xff]
          %v353 = vld [vmem:[%s2 + $0x68] sm:$0xff]
          %v354 = vld [vmem:[%s2 + $0x70] sm:$0xff]
          %v355 = vld [vmem:[%s2 + $0x78] sm:$0xff]
          %v356 = vld [vmem:[%s2 + $0x80] sm:$0xff]
          %v357 = vld [vmem:[%s2 + $0x88] sm:$0xff]
          %v358 = vld [vmem:[%s2 + $0x90] sm:$0xff]
          %v359 = vld [vmem:[%s2 + $0x98] sm:$0xff]
          %v360 = vld [vmem:[%s2 + $0xa0] sm:$0xff]
          %v361 = vld [vmem:[%s2 + $0xa8] sm:$0xff]
          %v362 = vld [vmem:[%s2 + $0xb0] sm:$0xff]
          %v363 = vld [vmem:[%s2 + $0xb8] sm:$0xff]
          %v364 = vld [vmem:[%s2 + $0xc0] sm:$0xff]
          %v365 = vld [vmem:[%s2 + $0xc8] sm:$0xff]
          %v366 = vld [vmem:[%s2 + $0xd0] sm:$0xff]
          %v367 = vld [vmem:[%s2 + $0xd8] sm:$0xff]
          %v368 = vld [vmem:[%s2 + $0xe0] sm:$0xff]
          %v369 = vld [vmem:[%s2 + $0xe8] sm:$0xff]
          %v370 = vld [vmem:[%s2 + $0xf0] sm:$0xff]
          %v371 = vld [vmem:[%s2 + $0xf8] sm:$0xff]
          %v372 = vld [vmem:[%s3] sm:$0x3]
          %v374 = vlaneseq
          %v375 = vshrl.u32 %v374, 7
          %v376 = vsub.s32 0, %v375
          %v377 = vrot.slane %v372, %v376
          %v378 = vlaneseq
          %v379 = vshrl.u32 %v378, 7
          %v380 = vsub.s32 1, %v379
          %v381 = vrot.slane %v372, %v380
          %384 = vmatprep.subr.mxu0 %v341
          %385 = vmatpush1.msra.mxu0 %v340
          %386 = vmatprep.subr.mxu0 %v343
          %387 = vmatpush1.msra.mxu0 %v342
          %388 = vmatprep.subr.mxu0 %v345
          %389 = vmatpush1.msra.mxu0 %v344
          %390 = vmatprep.subr.mxu0 %v347
          %391 = vmatpush1.msra.mxu0 %v346
          %392 = vmatprep.subr.mxu0 %v349
          %393 = vmatpush1.msra.mxu0 %v348
          %394 = vmatprep.subr.mxu0 %v351
          %395 = vmatpush1.msra.mxu0 %v350
          %396 = vmatprep.subr.mxu0 %v353
          %397 = vmatpush1.msra.mxu0 %v352
          %398 = vmatprep.subr.mxu0 %v355
          %399 = vmatpush1.msra.mxu0 %v354
          %400 = vmatprep.subr.mxu0 %v357
          %401 = vmatpush1.msra.mxu0 %v356
          %402 = vmatprep.subr.mxu0 %v359
          %403 = vmatpush1.msra.mxu0 %v358
          %404 = vmatprep.subr.mxu0 %v361
          %405 = vmatpush1.msra.mxu0 %v360
          %406 = vmatprep.subr.mxu0 %v363
          %407 = vmatpush1.msra.mxu0 %v362
          %408 = vmatprep.subr.mxu0 %v365
          %409 = vmatpush1.msra.mxu0 %v364
          %410 = vmatprep.subr.mxu0 %v367
          %411 = vmatpush1.msra.mxu0 %v366
          %412 = vmatprep.subr.mxu0 %v369
          %413 = vmatpush1.msra.mxu0 %v368
          %414 = vmatprep.subr.mxu0 %v371
          %415 = vmatpush1.msra.mxu0 %v370
          %416 = vmatprep.subr.mxu0 0.0
          %417 = vmatpush1.msra.mxu0 0.0
          %418 = vmatprep.subr.mxu0 0.0
          %419 = vmatpush1.msra.mxu0 0.0
          %420 = vmatprep.subr.mxu0 0.0
          %421 = vmatpush1.msra.mxu0 0.0
          %422 = vmatprep.subr.mxu0 0.0
          %423 = vmatpush1.msra.mxu0 0.0
          %424 = vmatprep.subr.mxu0 0.0
          %425 = vmatpush1.msra.mxu0 0.0
          %426 = vmatprep.subr.mxu0 0.0
          %427 = vmatpush1.msra.mxu0 0.0
          %428 = vmatprep.subr.mxu0 0.0
          %429 = vmatpush1.msra.mxu0 0.0
          %430 = vmatprep.subr.mxu0 0.0
          %431 = vmatpush1.msra.mxu0 0.0
          %432 = vmatprep.subr.mxu0 0.0
          %433 = vmatpush1.msra.mxu0 0.0
          %434 = vmatprep.subr.mxu0 0.0
          %435 = vmatpush1.msra.mxu0 0.0
          %436 = vmatprep.subr.mxu0 0.0
          %437 = vmatpush1.msra.mxu0 0.0
          %438 = vmatprep.subr.mxu0 0.0
          %439 = vmatpush1.msra.mxu0 0.0
          %440 = vmatprep.subr.mxu0 0.0
          %441 = vmatpush1.msra.mxu0 0.0
          %442 = vmatprep.subr.mxu0 0.0
          %443 = vmatpush1.msra.mxu0 0.0
          %444 = vmatprep.subr.mxu0 0.0
          %445 = vmatpush1.msra.mxu0 0.0
          %446 = vmatprep.subr.mxu0 0.0
          %447 = vmatpush1.msra.mxu0 0.0
          %448 = vmatprep.mubr.f32.mxu0 0.0
          %449 = vmatmul.mubr.f32.gmra.mrb[0].mxu0 %v308
          %v450 = vpop.f32.mrb[0].mxu0
          %v451 = vadd.f32 %v377, %v450
          %v452 = vpop.f32.mrb[0].mxu0
          %v453 = vadd.f32 %v381, %v452
          %454 = vmatprep.mubr.f32.mxu0 0.0
          %455 = vmatmul.mubr.f32.gmra.mrb[0].mxu0 %v309
          %v456 = vpop.f32.mrb[0].mxu0
          %v457 = vadd.f32 %v377, %v456
          %v458 = vpop.f32.mrb[0].mxu0
          %v459 = vadd.f32 %v381, %v458
          %460 = vmatprep.mubr.f32.mxu0 0.0
          %461 = vmatmul.mubr.f32.gmra.mrb[0].mxu0 %v310
          %v462 = vpop.f32.mrb[0].mxu0
          %v463 = vadd.f32 %v377, %v462
          %v464 = vpop.f32.mrb[0].mxu0
          %v465 = vadd.f32 %v381, %v464
          %466 = vmatprep.mubr.f32.mxu0 0.0
          %467 = vmatmul.mubr.f32.gmra.mrb[0].mxu0 %v311
          %v468 = vpop.f32.mrb[0].mxu0
          %v469 = vadd.f32 %v377, %v468
          %v470 = vpop.f32.mrb[0].mxu0
          %v471 = vadd.f32 %v381, %v470
          %472 = vmatprep.mubr.f32.mxu0 0.0
          %473 = vmatmul.mubr.f32.gmra.mrb[0].mxu0 %v312
          %v474 = vpop.f32.mrb[0].mxu0
          %v475 = vadd.f32 %v377, %v474
          %v476 = vpop.f32.mrb[0].mxu0
          %v477 = vadd.f32 %v381, %v476
          %478 = vmatprep.mubr.f32.mxu0 0.0
          %479 = vmatmul.mubr.f32.gmra.mrb[0].mxu0 %v313
          %v480 = vpop.f32.mrb[0].mxu0
          %v481 = vadd.f32 %v377, %v480
          %v482 = vpop.f32.mrb[0].mxu0
          %v483 = vadd.f32 %v381, %v482
          %484 = vmatprep.mubr.f32.mxu0 0.0
          %485 = vmatmul.mubr.f32.gmra.mrb[0].mxu0 %v314
          %v486 = vpop.f32.mrb[0].mxu0
          %v487 = vadd.f32 %v377, %v486
          %v488 = vpop.f32.mrb[0].mxu0
          %v489 = vadd.f32 %v381, %v488
          %490 = vmatprep.mubr.f32.mxu0 0.0
          %491 = vmatmul.mubr.f32.gmra.mrb[0].mxu0 %v315
          %v492 = vpop.f32.mrb[0].mxu0
          %v493 = vadd.f32 %v377, %v492
          %v494 = vpop.f32.mrb[0].mxu0
          %v495 = vadd.f32 %v381, %v494
          %496 = vmatprep.mubr.f32.mxu0 0.0
          %497 = vmatmul.mubr.f32.gmra.mrb[0].mxu0 %v316
          %v498 = vpop.f32.mrb[0].mxu0
          %v499 = vadd.f32 %v377, %v498
          %v500 = vpop.f32.mrb[0].mxu0
          %v501 = vadd.f32 %v381, %v500
          %502 = vmatprep.mubr.f32.mxu0 0.0
          %503 = vmatmul.mubr.f32.gmra.mrb[0].mxu0 %v317
          %v504 = vpop.f32.mrb[0].mxu0
          %v505 = vadd.f32 %v377, %v504
          %v506 = vpop.f32.mrb[0].mxu0
          %v507 = vadd.f32 %v381, %v506
          %508 = vmatprep.mubr.f32.mxu0 0.0
          %509 = vmatmul.mubr.f32.gmra.mrb[0].mxu0 %v318
          %v510 = vpop.f32.mrb[0].mxu0
          %v511 = vadd.f32 %v377, %v510
          %v512 = vpop.f32.mrb[0].mxu0
          %v513 = vadd.f32 %v381, %v512
          %514 = vmatprep.mubr.f32.mxu0 0.0
          %515 = vmatmul.mubr.f32.gmra.mrb[0].mxu0 %v319
          %v516 = vpop.f32.mrb[0].mxu0
          %v517 = vadd.f32 %v377, %v516
          %v518 = vpop.f32.mrb[0].mxu0
          %v519 = vadd.f32 %v381, %v518
          %520 = vmatprep.mubr.f32.mxu0 0.0
          %521 = vmatmul.mubr.f32.gmra.mrb[0].mxu0 %v320
          %v522 = vpop.f32.mrb[0].mxu0
          %v523 = vadd.f32 %v377, %v522
          %v524 = vpop.f32.mrb[0].mxu0
          %v525 = vadd.f32 %v381, %v524
          %526 = vmatprep.mubr.f32.mxu0 0.0
          %527 = vmatmul.mubr.f32.gmra.mrb[0].mxu0 %v321
          %v528 = vpop.f32.mrb[0].mxu0
          %v529 = vadd.f32 %v377, %v528
          %v530 = vpop.f32.mrb[0].mxu0
          %v531 = vadd.f32 %v381, %v530
          %532 = vmatprep.mubr.f32.mxu0 0.0
          %533 = vmatmul.mubr.f32.gmra.mrb[0].mxu0 %v322
          %v534 = vpop.f32.mrb[0].mxu0
          %v535 = vadd.f32 %v377, %v534
          %v536 = vpop.f32.mrb[0].mxu0
          %v537 = vadd.f32 %v381, %v536
          %538 = vmatprep.mubr.f32.mxu0 0.0
          %539 = vmatmul.mubr.f32.gmra.mrb[0].mxu0 %v323
          %v540 = vpop.f32.mrb[0].mxu0
          %v541 = vadd.f32 %v377, %v540
          %v542 = vpop.f32.mrb[0].mxu0
          %v543 = vadd.f32 %v381, %v542
          %544 = vmatprep.mubr.f32.mxu0 0.0
          %545 = vmatmul.mubr.f32.gmra.mrb[0].mxu0 %v324
          %v546 = vpop.f32.mrb[0].mxu0
          %v547 = vadd.f32 %v377, %v546
          %v548 = vpop.f32.mrb[0].mxu0
          %v549 = vadd.f32 %v381, %v548
          %550 = vmatprep.mubr.f32.mxu0 0.0
          %551 = vmatmul.mubr.f32.gmra.mrb[0].mxu0 %v325
          %v552 = vpop.f32.mrb[0].mxu0
          %v553 = vadd.f32 %v377, %v552
          %v554 = vpop.f32.mrb[0].mxu0
          %v555 = vadd.f32 %v381, %v554
          %556 = vmatprep.mubr.f32.mxu0 0.0
          %557 = vmatmul.mubr.f32.gmra.mrb[0].mxu0 %v326
          %v558 = vpop.f32.mrb[0].mxu0
          %v559 = vadd.f32 %v377, %v558
          %v560 = vpop.f32.mrb[0].mxu0
          %v561 = vadd.f32 %v381, %v560
          %562 = vmatprep.mubr.f32.mxu0 0.0
          %563 = vmatmul.mubr.f32.gmra.mrb[0].mxu0 %v327
          %v564 = vpop.f32.mrb[0].mxu0
          %v565 = vadd.f32 %v377, %v564
          %v566 = vpop.f32.mrb[0].mxu0
          %v567 = vadd.f32 %v381, %v566
          %568 = vmatprep.mubr.f32.mxu0 0.0
          %569 = vmatmul.mubr.f32.gmra.mrb[0].mxu0 %v328
          %v570 = vpop.f32.mrb[0].mxu0
          %v571 = vadd.f32 %v377, %v570
          %v572 = vpop.f32.mrb[0].mxu0
          %v573 = vadd.f32 %v381, %v572
          %574 = vmatprep.mubr.f32.mxu0 0.0
          %575 = vmatmul.mubr.f32.gmra.mrb[0].mxu0 %v329
          %v576 = vpop.f32.mrb[0].mxu0
          %v577 = vadd.f32 %v377, %v576
          %v578 = vpop.f32.mrb[0].mxu0
          %v579 = vadd.f32 %v381, %v578
          %580 = vmatprep.mubr.f32.mxu0 0.0
          %581 = vmatmul.mubr.f32.gmra.mrb[0].mxu0 %v330
          %v582 = vpop.f32.mrb[0].mxu0
          %v583 = vadd.f32 %v377, %v582
          %v584 = vpop.f32.mrb[0].mxu0
          %v585 = vadd.f32 %v381, %v584
          %586 = vmatprep.mubr.f32.mxu0 0.0
          %587 = vmatmul.mubr.f32.gmra.mrb[0].mxu0 %v331
          %v588 = vpop.f32.mrb[0].mxu0
          %v589 = vadd.f32 %v377, %v588
          %v590 = vpop.f32.mrb[0].mxu0
          %v591 = vadd.f32 %v381, %v590
          %592 = vmatprep.mubr.f32.mxu0 0.0
          %593 = vmatmul.mubr.f32.gmra.mrb[0].mxu0 %v332
          %v594 = vpop.f32.mrb[0].mxu0
          %v595 = vadd.f32 %v377, %v594
          %v596 = vpop.f32.mrb[0].mxu0
          %v597 = vadd.f32 %v381, %v596
          %598 = vmatprep.mubr.f32.mxu0 0.0
          %599 = vmatmul.mubr.f32.gmra.mrb[0].mxu0 %v333
          %v600 = vpop.f32.mrb[0].mxu0
          %v601 = vadd.f32 %v377, %v600
          %v602 = vpop.f32.mrb[0].mxu0
          %v603 = vadd.f32 %v381, %v602
          %604 = vmatprep.mubr.f32.mxu0 0.0
          %605 = vmatmul.mubr.f32.gmra.mrb[0].mxu0 %v334
          %v606 = vpop.f32.mrb[0].mxu0
          %v607 = vadd.f32 %v377, %v606
          %v608 = vpop.f32.mrb[0].mxu0
          %v609 = vadd.f32 %v381, %v608
          %610 = vmatprep.mubr.f32.mxu0 0.0
          %611 = vmatmul.mubr.f32.gmra.mrb[0].mxu0 %v335
          %v612 = vpop.f32.mrb[0].mxu0
          %v613 = vadd.f32 %v377, %v612
          %v614 = vpop.f32.mrb[0].mxu0
          %v615 = vadd.f32 %v381, %v614
          %616 = vmatprep.mubr.f32.mxu0 0.0
          %617 = vmatmul.mubr.f32.gmra.mrb[0].mxu0 %v336
          %v618 = vpop.f32.mrb[0].mxu0
          %v619 = vadd.f32 %v377, %v618
          %v620 = vpop.f32.mrb[0].mxu0
          %v621 = vadd.f32 %v381, %v620
          %622 = vmatprep.mubr.f32.mxu0 0.0
          %623 = vmatmul.mubr.f32.gmra.mrb[0].mxu0 %v337
          %v624 = vpop.f32.mrb[0].mxu0
          %v625 = vadd.f32 %v377, %v624
          %v626 = vpop.f32.mrb[0].mxu0
          %v627 = vadd.f32 %v381, %v626
          %628 = vmatprep.mubr.f32.mxu0 0.0
          %629 = vmatmul.mubr.f32.gmra.mrb[0].mxu0 %v338
          %v630 = vpop.f32.mrb[0].mxu0
          %v631 = vadd.f32 %v377, %v630
          %v632 = vpop.f32.mrb[0].mxu0
          %v633 = vadd.f32 %v381, %v632
          %634 = vmatprep.mubr.f32.mxu0 0.0
          %635 = vmatmul.mubr.f32.gmra.mrb[0].mxu0 %v339
          %v636 = vpop.f32.mrb[0].mxu0
          %v637 = vadd.f32 %v377, %v636
          %v638 = vpop.f32.mrb[0].mxu0
          %v639 = vadd.f32 %v381, %v638
          %640 = vdwg.mxu0
          %641 = vst [vmem:[#allocation4] sm:$0xff] %v451
          %642 = vst [vmem:[#allocation4 + $0x8] sm:$0xff] %v457
          %643 = vst [vmem:[#allocation4 + $0x10] sm:$0xff] %v463
          %644 = vst [vmem:[#allocation4 + $0x18] sm:$0xff] %v469
          %645 = vst [vmem:[#allocation4 + $0x20] sm:$0xff] %v475
          %646 = vst [vmem:[#allocation4 + $0x28] sm:$0xff] %v481
          %647 = vst [vmem:[#allocation4 + $0x30] sm:$0xff] %v487
          %648 = vst [vmem:[#allocation4 + $0x38] sm:$0xff] %v493
          %649 = vst [vmem:[#allocation4 + $0x40] sm:$0xff] %v499
          %650 = vst [vmem:[#allocation4 + $0x48] sm:$0xff] %v505
          %651 = vst [vmem:[#allocation4 + $0x50] sm:$0xff] %v511
          %652 = vst [vmem:[#allocation4 + $0x58] sm:$0xff] %v517
          %653 = vst [vmem:[#allocation4 + $0x60] sm:$0xff] %v523
          %654 = vst [vmem:[#allocation4 + $0x68] sm:$0xff] %v529
          %655 = vst [vmem:[#allocation4 + $0x70] sm:$0xff] %v535
          %656 = vst [vmem:[#allocation4 + $0x78] sm:$0xff] %v541
          %657 = vst [vmem:[#allocation4 + $0x80] sm:$0xff] %v547
          %658 = vst [vmem:[#allocation4 + $0x88] sm:$0xff] %v553
          %659 = vst [vmem:[#allocation4 + $0x90] sm:$0xff] %v559
          %660 = vst [vmem:[#allocation4 + $0x98] sm:$0xff] %v565
          %661 = vst [vmem:[#allocation4 + $0xa0] sm:$0xff] %v571
          %662 = vst [vmem:[#allocation4 + $0xa8] sm:$0xff] %v577
          %663 = vst [vmem:[#allocation4 + $0xb0] sm:$0xff] %v583
          %664 = vst [vmem:[#allocation4 + $0xb8] sm:$0xff] %v589
          %665 = vst [vmem:[#allocation4 + $0xc0] sm:$0xff] %v595
          %666 = vst [vmem:[#allocation4 + $0xc8] sm:$0xff] %v601
          %667 = vst [vmem:[#allocation4 + $0xd0] sm:$0xff] %v607
          %668 = vst [vmem:[#allocation4 + $0xd8] sm:$0xff] %v613
          %669 = vst [vmem:[#allocation4 + $0xe0] sm:$0xff] %v619
          %670 = vst [vmem:[#allocation4 + $0xe8] sm:$0xff] %v625
          %671 = vst [vmem:[#allocation4 + $0xf0] sm:$0xff] %v631
          %672 = vst [vmem:[#allocation4 + $0xf8] sm:$0xff] %v637
          %vm673 = vcmask 64512
          %674 = vst.msk [vmem:[#allocation2] sm:$0xff] %vm673, %v453
          %675 = vst.msk [vmem:[#allocation2 + $0x8] sm:$0xff] %vm673, %v459
          %676 = vst.msk [vmem:[#allocation2 + $0x10] sm:$0xff] %vm673, %v465
          %677 = vst.msk [vmem:[#allocation2 + $0x18] sm:$0xff] %vm673, %v471
          %678 = vst.msk [vmem:[#allocation2 + $0x20] sm:$0xff] %vm673, %v477
          %679 = vst.msk [vmem:[#allocation2 + $0x28] sm:$0xff] %vm673, %v483
          %680 = vst.msk [vmem:[#allocation2 + $0x30] sm:$0xff] %vm673, %v489
          %681 = vst.msk [vmem:[#allocation2 + $0x38] sm:$0xff] %vm673, %v495
          %682 = vst.msk [vmem:[#allocation2 + $0x40] sm:$0xff] %vm673, %v501
          %683 = vst.msk [vmem:[#allocation2 + $0x48] sm:$0xff] %vm673, %v507
          %684 = vst.msk [vmem:[#allocation2 + $0x50] sm:$0xff] %vm673, %v513
          %685 = vst.msk [vmem:[#allocation2 + $0x58] sm:$0xff] %vm673, %v519
          %686 = vst.msk [vmem:[#allocation2 + $0x60] sm:$0xff] %vm673, %v525
          %687 = vst.msk [vmem:[#allocation2 + $0x68] sm:$0xff] %vm673, %v531
          %688 = vst.msk [vmem:[#allocation2 + $0x70] sm:$0xff] %vm673, %v537
          %689 = vst.msk [vmem:[#allocation2 + $0x78] sm:$0xff] %vm673, %v543
          %690 = vst.msk [vmem:[#allocation2 + $0x80] sm:$0xff] %vm673, %v549
          %691 = vst.msk [vmem:[#allocation2 + $0x88] sm:$0xff] %vm673, %v555
          %692 = vst.msk [vmem:[#allocation2 + $0x90] sm:$0xff] %vm673, %v561
          %693 = vst.msk [vmem:[#allocation2 + $0x98] sm:$0xff] %vm673, %v567
          %694 = vst.msk [vmem:[#allocation2 + $0xa0] sm:$0xff] %vm673, %v573
          %695 = vst.msk [vmem:[#allocation2 + $0xa8] sm:$0xff] %vm673, %v579
          %696 = vst.msk [vmem:[#allocation2 + $0xb0] sm:$0xff] %vm673, %v585
          %697 = vst.msk [vmem:[#allocation2 + $0xb8] sm:$0xff] %vm673, %v591
          %698 = vst.msk [vmem:[#allocation2 + $0xc0] sm:$0xff] %vm673, %v597
          %699 = vst.msk [vmem:[#allocation2 + $0xc8] sm:$0xff] %vm673, %v603
          %700 = vst.msk [vmem:[#allocation2 + $0xd0] sm:$0xff] %vm673, %v609
          %701 = vst.msk [vmem:[#allocation2 + $0xd8] sm:$0xff] %vm673, %v615
          %702 = vst.msk [vmem:[#allocation2 + $0xe0] sm:$0xff] %vm673, %v621
          %703 = vst.msk [vmem:[#allocation2 + $0xe8] sm:$0xff] %vm673, %v627
          %704 = vst.msk [vmem:[#allocation2 + $0xf0] sm:$0xff] %vm673, %v633
          %705 = vst.msk [vmem:[#allocation2 + $0xf8] sm:$0xff] %vm673, %v639
          %738 = vrot.lane.b32.xlu0 %v453, 120
          %v739 = vpop.permute.xlu0 %738
          %740 = vrot.lane.b32.xlu0 %v459, 120
          %v741 = vpop.permute.xlu0 %740
          %742 = vrot.lane.b32.xlu0 %v465, 120
          %v743 = vpop.permute.xlu0 %742
          %744 = vrot.lane.b32.xlu0 %v471, 120
          %v745 = vpop.permute.xlu0 %744
          %746 = vrot.lane.b32.xlu0 %v477, 120
          %v747 = vpop.permute.xlu0 %746
          %748 = vrot.lane.b32.xlu0 %v483, 120
          %v749 = vpop.permute.xlu0 %748
          %750 = vrot.lane.b32.xlu0 %v489, 120
          %v751 = vpop.permute.xlu0 %750
          %752 = vrot.lane.b32.xlu0 %v495, 120
          %v753 = vpop.permute.xlu0 %752
          %754 = vrot.lane.b32.xlu0 %v501, 120
          %v755 = vpop.permute.xlu0 %754
          %756 = vrot.lane.b32.xlu0 %v507, 120
          %v757 = vpop.permute.xlu0 %756
          %758 = vrot.lane.b32.xlu0 %v513, 120
          %v759 = vpop.permute.xlu0 %758
          %760 = vrot.lane.b32.xlu0 %v519, 120
          %v761 = vpop.permute.xlu0 %760
          %762 = vrot.lane.b32.xlu0 %v525, 120
          %v763 = vpop.permute.xlu0 %762
          %764 = vrot.lane.b32.xlu0 %v531, 120
          %v765 = vpop.permute.xlu0 %764
          %766 = vrot.lane.b32.xlu0 %v537, 120
          %v767 = vpop.permute.xlu0 %766
          %768 = vrot.lane.b32.xlu0 %v543, 120
          %v769 = vpop.permute.xlu0 %768
          %770 = vrot.lane.b32.xlu0 %v549, 120
          %v771 = vpop.permute.xlu0 %770
          %772 = vrot.lane.b32.xlu0 %v555, 120
          %v773 = vpop.permute.xlu0 %772
          %774 = vrot.lane.b32.xlu0 %v561, 120
          %v775 = vpop.permute.xlu0 %774
          %776 = vrot.lane.b32.xlu0 %v567, 120
          %v777 = vpop.permute.xlu0 %776
          %778 = vrot.lane.b32.xlu0 %v573, 120
          %v779 = vpop.permute.xlu0 %778
          %780 = vrot.lane.b32.xlu0 %v579, 120
          %v781 = vpop.permute.xlu0 %780
          %782 = vrot.lane.b32.xlu0 %v585, 120
          %v783 = vpop.permute.xlu0 %782
          %784 = vrot.lane.b32.xlu0 %v591, 120
          %v785 = vpop.permute.xlu0 %784
          %786 = vrot.lane.b32.xlu0 %v597, 120
          %v787 = vpop.permute.xlu0 %786
          %788 = vrot.lane.b32.xlu0 %v603, 120
          %v789 = vpop.permute.xlu0 %788
          %790 = vrot.lane.b32.xlu0 %v609, 120
          %v791 = vpop.permute.xlu0 %790
          %792 = vrot.lane.b32.xlu0 %v615, 120
          %v793 = vpop.permute.xlu0 %792
          %794 = vrot.lane.b32.xlu0 %v621, 120
          %v795 = vpop.permute.xlu0 %794
          %796 = vrot.lane.b32.xlu0 %v627, 120
          %v797 = vpop.permute.xlu0 %796
          %798 = vrot.lane.b32.xlu0 %v633, 120
          %v799 = vpop.permute.xlu0 %798
          %800 = vrot.lane.b32.xlu0 %v639, 120
          %v801 = vpop.permute.xlu0 %800
          %834 = vst.msk [vmem:[#allocation3] sm:$0xff] %vm673, %v739
          %835 = vst.msk [vmem:[#allocation3 + $0x8] sm:$0xff] %vm673, %v741
          %836 = vst.msk [vmem:[#allocation3 + $0x10] sm:$0xff] %vm673, %v743
          %837 = vst.msk [vmem:[#allocation3 + $0x18] sm:$0xff] %vm673, %v745
          %838 = vst.msk [vmem:[#allocation3 + $0x20] sm:$0xff] %vm673, %v747
          %839 = vst.msk [vmem:[#allocation3 + $0x28] sm:$0xff] %vm673, %v749
          %840 = vst.msk [vmem:[#allocation3 + $0x30] sm:$0xff] %vm673, %v751
          %841 = vst.msk [vmem:[#allocation3 + $0x38] sm:$0xff] %vm673, %v753
          %842 = vst.msk [vmem:[#allocation3 + $0x40] sm:$0xff] %vm673, %v755
          %843 = vst.msk [vmem:[#allocation3 + $0x48] sm:$0xff] %vm673, %v757
          %844 = vst.msk [vmem:[#allocation3 + $0x50] sm:$0xff] %vm673, %v759
          %845 = vst.msk [vmem:[#allocation3 + $0x58] sm:$0xff] %vm673, %v761
          %846 = vst.msk [vmem:[#allocation3 + $0x60] sm:$0xff] %vm673, %v763
          %847 = vst.msk [vmem:[#allocation3 + $0x68] sm:$0xff] %vm673, %v765
          %848 = vst.msk [vmem:[#allocation3 + $0x70] sm:$0xff] %vm673, %v767
          %849 = vst.msk [vmem:[#allocation3 + $0x78] sm:$0xff] %vm673, %v769
          %850 = vst.msk [vmem:[#allocation3 + $0x80] sm:$0xff] %vm673, %v771
          %851 = vst.msk [vmem:[#allocation3 + $0x88] sm:$0xff] %vm673, %v773
          %852 = vst.msk [vmem:[#allocation3 + $0x90] sm:$0xff] %vm673, %v775
          %853 = vst.msk [vmem:[#allocation3 + $0x98] sm:$0xff] %vm673, %v777
          %854 = vst.msk [vmem:[#allocation3 + $0xa0] sm:$0xff] %vm673, %v779
          %855 = vst.msk [vmem:[#allocation3 + $0xa8] sm:$0xff] %vm673, %v781
          %856 = vst.msk [vmem:[#allocation3 + $0xb0] sm:$0xff] %vm673, %v783
          %857 = vst.msk [vmem:[#allocation3 + $0xb8] sm:$0xff] %vm673, %v785
          %858 = vst.msk [vmem:[#allocation3 + $0xc0] sm:$0xff] %vm673, %v787
          %859 = vst.msk [vmem:[#allocation3 + $0xc8] sm:$0xff] %vm673, %v789
          %860 = vst.msk [vmem:[#allocation3 + $0xd0] sm:$0xff] %vm673, %v791
          %861 = vst.msk [vmem:[#allocation3 + $0xd8] sm:$0xff] %vm673, %v793
          %862 = vst.msk [vmem:[#allocation3 + $0xe0] sm:$0xff] %vm673, %v795
          %863 = vst.msk [vmem:[#allocation3 + $0xe8] sm:$0xff] %vm673, %v797
          %864 = vst.msk [vmem:[#allocation3 + $0xf0] sm:$0xff] %vm673, %v799
          %865 = vst.msk [vmem:[#allocation3 + $0xf8] sm:$0xff] %vm673, %v801
        $region52: #{tpu_custom_call.1} parent=39 // pred_fallthru
          _
        %s866 = smul.u32 %s31, 128
        %s867 = scalar_lea.vmem [#allocation2], %s866
        %v868 = vld [vmem:[%s867] sm:$0xff]
        %v869 = vld [vmem:[%s867 + $0x8] sm:$0xff]
        %v870 = vld [vmem:[%s867 + $0x10] sm:$0xff]
        %v871 = vld [vmem:[%s867 + $0x18] sm:$0xff]
        %v872 = vld [vmem:[%s867 + $0x20] sm:$0xff]
        %v873 = vld [vmem:[%s867 + $0x28] sm:$0xff]
        %v874 = vld [vmem:[%s867 + $0x30] sm:$0xff]
        %v875 = vld [vmem:[%s867 + $0x38] sm:$0xff]
        %v876 = vld [vmem:[%s867 + $0x40] sm:$0xff]
        %v877 = vld [vmem:[%s867 + $0x48] sm:$0xff]
        %v878 = vld [vmem:[%s867 + $0x50] sm:$0xff]
        %v879 = vld [vmem:[%s867 + $0x58] sm:$0xff]
        %v880 = vld [vmem:[%s867 + $0x60] sm:$0xff]
        %v881 = vld [vmem:[%s867 + $0x68] sm:$0xff]
        %v882 = vld [vmem:[%s867 + $0x70] sm:$0xff]
        %v883 = vld [vmem:[%s867 + $0x78] sm:$0xff]
        %v884 = vld [vmem:[#allocation3] sm:$0xff]
        %v885 = vld [vmem:[#allocation3 + $0x8] sm:$0xff]
        %v886 = vld [vmem:[#allocation3 + $0x10] sm:$0xff]
        %v887 = vld [vmem:[#allocation3 + $0x18] sm:$0xff]
        %v888 = vld [vmem:[#allocation3 + $0x20] sm:$0xff]
        %v889 = vld [vmem:[#allocation3 + $0x28] sm:$0xff]
        %v890 = vld [vmem:[#allocation3 + $0x30] sm:$0xff]
        %v891 = vld [vmem:[#allocation3 + $0x38] sm:$0xff]
        %v892 = vld [vmem:[#allocation3 + $0x40] sm:$0xff]
        %v893 = vld [vmem:[#allocation3 + $0x48] sm:$0xff]
        %v894 = vld [vmem:[#allocation3 + $0x50] sm:$0xff]
        %v895 = vld [vmem:[#allocation3 + $0x58] sm:$0xff]
        %v896 = vld [vmem:[#allocation3 + $0x60] sm:$0xff]
        %v897 = vld [vmem:[#allocation3 + $0x68] sm:$0xff]
        %v898 = vld [vmem:[#allocation3 + $0x70] sm:$0xff]
        %v899 = vld [vmem:[#allocation3 + $0x78] sm:$0xff]
        %v900 = vld [vmem:[#allocation3 + $0x80] sm:$0xff]
        %v901 = vld [vmem:[#allocation3 + $0x88] sm:$0xff]
        %v902 = vld [vmem:[#allocation3 + $0x90] sm:$0xff]
        %v903 = vld [vmem:[#allocation3 + $0x98] sm:$0xff]
        %v904 = vld [vmem:[#allocation3 + $0xa0] sm:$0xff]
        %v905 = vld [vmem:[#allocation3 + $0xa8] sm:$0xff]
        %v906 = vld [vmem:[#allocation3 + $0xb0] sm:$0xff]
        %v907 = vld [vmem:[#allocation3 + $0xb8] sm:$0xff]
        %v908 = vld [vmem:[#allocation3 + $0xc0] sm:$0xff]
        %v909 = vld [vmem:[#allocation3 + $0xc8] sm:$0xff]
        %v910 = vld [vmem:[#allocation3 + $0xd0] sm:$0xff]
        %v911 = vld [vmem:[#allocation3 + $0xd8] sm:$0xff]
        %v912 = vld [vmem:[#allocation3 + $0xe0] sm:$0xff]
        %v913 = vld [vmem:[#allocation3 + $0xe8] sm:$0xff]
        %v914 = vld [vmem:[#allocation3 + $0xf0] sm:$0xff]
        %v915 = vld [vmem:[#allocation3 + $0xf8] sm:$0xff]
        %vm916 = vcmask 64512
        %v918 = vsel %vm916, %v868, 0
        %v921 = vsel %vm916, %v869, 0
        %v924 = vsel %vm916, %v870, 0
        %v927 = vsel %vm916, %v871, 0
        %v930 = vsel %vm916, %v872, 0
        %v933 = vsel %vm916, %v873, 0
        %v936 = vsel %vm916, %v874, 0
        %v939 = vsel %vm916, %v875, 0
        %v942 = vsel %vm916, %v876, 0
        %v945 = vsel %vm916, %v877, 0
        %v948 = vsel %vm916, %v878, 0
        %v951 = vsel %vm916, %v879, 0
        %v954 = vsel %vm916, %v880, 0
        %v957 = vsel %vm916, %v881, 0
        %v960 = vsel %vm916, %v882, 0
        %v963 = vsel %vm916, %v883, 0
        %v966 = vsel %vm916, %v884, 0
        %v969 = vsel %vm916, %v885, 0
        %v972 = vsel %vm916, %v886, 0
        %v975 = vsel %vm916, %v887, 0
        %v978 = vsel %vm916, %v888, 0
        %v981 = vsel %vm916, %v889, 0
        %v984 = vsel %vm916, %v890, 0
        %v987 = vsel %vm916, %v891, 0
        %v990 = vsel %vm916, %v892, 0
        %v993 = vsel %vm916, %v893, 0
        %v996 = vsel %vm916, %v894, 0
        %v999 = vsel %vm916, %v895, 0
        %v1002 = vsel %vm916, %v896, 0
        %v1005 = vsel %vm916, %v897, 0
        %v1008 = vsel %vm916, %v898, 0
        %v1011 = vsel %vm916, %v899, 0
        %v1014 = vsel %vm916, %v900, 0
        %v1017 = vsel %vm916, %v901, 0
        %v1020 = vsel %vm916, %v902, 0
        %v1023 = vsel %vm916, %v903, 0
        %v1026 = vsel %vm916, %v904, 0
        %v1029 = vsel %vm916, %v905, 0
        %v1032 = vsel %vm916, %v906, 0
        %v1035 = vsel %vm916, %v907, 0
        %v1038 = vsel %vm916, %v908, 0
        %v1041 = vsel %vm916, %v909, 0
        %v1044 = vsel %vm916, %v910, 0
        %v1047 = vsel %vm916, %v911, 0
        %v1050 = vsel %vm916, %v912, 0
        %v1053 = vsel %vm916, %v913, 0
        %v1056 = vsel %vm916, %v914, 0
        %v1059 = vsel %vm916, %v915, 0
        %1061 = vmatprep.subr.mxu0 0.0
        %1062 = vmatpush1.xpose.msra.mxu0 %v966
        %1063 = vmatprep.subr.mxu0 0.0
        %1064 = vmatpush1.xpose.msra.mxu0 %v969
        %1065 = vmatprep.subr.mxu0 0.0
        %1066 = vmatpush1.xpose.msra.mxu0 %v972
        %1067 = vmatprep.subr.mxu0 0.0
        %1068 = vmatpush1.xpose.msra.mxu0 %v975
        %1069 = vmatprep.subr.mxu0 0.0
        %1070 = vmatpush1.xpose.msra.mxu0 %v978
        %1071 = vmatprep.subr.mxu0 0.0
        %1072 = vmatpush1.xpose.msra.mxu0 %v981
        %1073 = vmatprep.subr.mxu0 0.0
        %1074 = vmatpush1.xpose.msra.mxu0 %v984
        %1075 = vmatprep.subr.mxu0 0.0
        %1076 = vmatpush1.xpose.msra.mxu0 %v987
        %1077 = vmatprep.subr.mxu0 0.0
        %1078 = vmatpush1.xpose.msra.mxu0 %v990
        %1079 = vmatprep.subr.mxu0 0.0
        %1080 = vmatpush1.xpose.msra.mxu0 %v993
        %1081 = vmatprep.subr.mxu0 0.0
        %1082 = vmatpush1.xpose.msra.mxu0 %v996
        %1083 = vmatprep.subr.mxu0 0.0
        %1084 = vmatpush1.xpose.msra.mxu0 %v999
        %1085 = vmatprep.subr.mxu0 0.0
        %1086 = vmatpush1.xpose.msra.mxu0 %v1002
        %1087 = vmatprep.subr.mxu0 0.0
        %1088 = vmatpush1.xpose.msra.mxu0 %v1005
        %1089 = vmatprep.subr.mxu0 0.0
        %1090 = vmatpush1.xpose.msra.mxu0 %v1008
        %1091 = vmatprep.subr.mxu0 0.0
        %1092 = vmatpush1.xpose.msra.mxu0 %v1011
        %1093 = vmatprep.subr.mxu0 0.0
        %1094 = vmatpush1.xpose.msra.mxu0 %v1014
        %1095 = vmatprep.subr.mxu0 0.0
        %1096 = vmatpush1.xpose.msra.mxu0 %v1017
        %1097 = vmatprep.subr.mxu0 0.0
        %1098 = vmatpush1.xpose.msra.mxu0 %v1020
        %1099 = vmatprep.subr.mxu0 0.0
        %1100 = vmatpush1.xpose.msra.mxu0 %v1023
        %1101 = vmatprep.subr.mxu0 0.0
        %1102 = vmatpush1.xpose.msra.mxu0 %v1026
        %1103 = vmatprep.subr.mxu0 0.0
        %1104 = vmatpush1.xpose.msra.mxu0 %v1029
        %1105 = vmatprep.subr.mxu0 0.0
        %1106 = vmatpush1.xpose.msra.mxu0 %v1032
        %1107 = vmatprep.subr.mxu0 0.0
        %1108 = vmatpush1.xpose.msra.mxu0 %v1035
        %1109 = vmatprep.subr.mxu0 0.0
        %1110 = vmatpush1.xpose.msra.mxu0 %v1038
        %1111 = vmatprep.subr.mxu0 0.0
        %1112 = vmatpush1.xpose.msra.mxu0 %v1041
        %1113 = vmatprep.subr.mxu0 0.0
        %1114 = vmatpush1.xpose.msra.mxu0 %v1044
        %1115 = vmatprep.subr.mxu0 0.0
        %1116 = vmatpush1.xpose.msra.mxu0 %v1047
        %1117 = vmatprep.subr.mxu0 0.0
        %1118 = vmatpush1.xpose.msra.mxu0 %v1050
        %1119 = vmatprep.subr.mxu0 0.0
        %1120 = vmatpush1.xpose.msra.mxu0 %v1053
        %1121 = vmatprep.subr.mxu0 0.0
        %1122 = vmatpush1.xpose.msra.mxu0 %v1056
        %1123 = vmatprep.subr.mxu0 0.0
        %1124 = vmatpush1.xpose.msra.mxu0 %v1059
        %1125 = vmatprep.mubr.f32.mxu0 0.0
        %1126 = vmatmul.mubr.f32.gmra.mrb[0].mxu0 %v918
        %v1127 = vpop.f32.mrb[0].mxu0
        %v1128 = vadd.f32 0.0, %v1127
        %v1129 = vpop.f32.mrb[0].mxu0
        %v1130 = vadd.f32 0.0, %v1129
        %1131 = vmatprep.mubr.f32.mxu0 0.0
        %1132 = vmatmul.mubr.f32.gmra.mrb[0].mxu0 %v921
        %v1133 = vpop.f32.mrb[0].mxu0
        %v1134 = vadd.f32 0.0, %v1133
        %v1135 = vpop.f32.mrb[0].mxu0
        %v1136 = vadd.f32 0.0, %v1135
        %1137 = vmatprep.mubr.f32.mxu0 0.0
        %1138 = vmatmul.mubr.f32.gmra.mrb[0].mxu0 %v924
        %v1139 = vpop.f32.mrb[0].mxu0
        %v1140 = vadd.f32 0.0, %v1139
        %v1141 = vpop.f32.mrb[0].mxu0
        %v1142 = vadd.f32 0.0, %v1141
        %1143 = vmatprep.mubr.f32.mxu0 0.0
        %1144 = vmatmul.mubr.f32.gmra.mrb[0].mxu0 %v927
        %v1145 = vpop.f32.mrb[0].mxu0
        %v1146 = vadd.f32 0.0, %v1145
        %v1147 = vpop.f32.mrb[0].mxu0
        %v1148 = vadd.f32 0.0, %v1147
        %1149 = vmatprep.mubr.f32.mxu0 0.0
        %1150 = vmatmul.mubr.f32.gmra.mrb[0].mxu0 %v930
        %v1151 = vpop.f32.mrb[0].mxu0
        %v1152 = vadd.f32 0.0, %v1151
        %v1153 = vpop.f32.mrb[0].mxu0
        %v1154 = vadd.f32 0.0, %v1153
        %1155 = vmatprep.mubr.f32.mxu0 0.0
        %1156 = vmatmul.mubr.f32.gmra.mrb[0].mxu0 %v933
        %v1157 = vpop.f32.mrb[0].mxu0
        %v1158 = vadd.f32 0.0, %v1157
        %v1159 = vpop.f32.mrb[0].mxu0
        %v1160 = vadd.f32 0.0, %v1159
        %1161 = vmatprep.mubr.f32.mxu0 0.0
        %1162 = vmatmul.mubr.f32.gmra.mrb[0].mxu0 %v936
        %v1163 = vpop.f32.mrb[0].mxu0
        %v1164 = vadd.f32 0.0, %v1163
        %v1165 = vpop.f32.mrb[0].mxu0
        %v1166 = vadd.f32 0.0, %v1165
        %1167 = vmatprep.mubr.f32.mxu0 0.0
        %1168 = vmatmul.mubr.f32.gmra.mrb[0].mxu0 %v939
        %v1169 = vpop.f32.mrb[0].mxu0
        %v1170 = vadd.f32 0.0, %v1169
        %v1171 = vpop.f32.mrb[0].mxu0
        %v1172 = vadd.f32 0.0, %v1171
        %1173 = vmatprep.mubr.f32.mxu0 0.0
        %1174 = vmatmul.mubr.f32.gmra.mrb[0].mxu0 %v942
        %v1175 = vpop.f32.mrb[0].mxu0
        %v1176 = vadd.f32 0.0, %v1175
        %v1177 = vpop.f32.mrb[0].mxu0
        %v1178 = vadd.f32 0.0, %v1177
        %1179 = vmatprep.mubr.f32.mxu0 0.0
        %1180 = vmatmul.mubr.f32.gmra.mrb[0].mxu0 %v945
        %v1181 = vpop.f32.mrb[0].mxu0
        %v1182 = vadd.f32 0.0, %v1181
        %v1183 = vpop.f32.mrb[0].mxu0
        %v1184 = vadd.f32 0.0, %v1183
        %1185 = vmatprep.mubr.f32.mxu0 0.0
        %1186 = vmatmul.mubr.f32.gmra.mrb[0].mxu0 %v948
        %v1187 = vpop.f32.mrb[0].mxu0
        %v1188 = vadd.f32 0.0, %v1187
        %v1189 = vpop.f32.mrb[0].mxu0
        %v1190 = vadd.f32 0.0, %v1189
        %1191 = vmatprep.mubr.f32.mxu0 0.0
        %1192 = vmatmul.mubr.f32.gmra.mrb[0].mxu0 %v951
        %v1193 = vpop.f32.mrb[0].mxu0
        %v1194 = vadd.f32 0.0, %v1193
        %v1195 = vpop.f32.mrb[0].mxu0
        %v1196 = vadd.f32 0.0, %v1195
        %1197 = vmatprep.mubr.f32.mxu0 0.0
        %1198 = vmatmul.mubr.f32.gmra.mrb[0].mxu0 %v954
        %v1199 = vpop.f32.mrb[0].mxu0
        %v1200 = vadd.f32 0.0, %v1199
        %v1201 = vpop.f32.mrb[0].mxu0
        %v1202 = vadd.f32 0.0, %v1201
        %1203 = vmatprep.mubr.f32.mxu0 0.0
        %1204 = vmatmul.mubr.f32.gmra.mrb[0].mxu0 %v957
        %v1205 = vpop.f32.mrb[0].mxu0
        %v1206 = vadd.f32 0.0, %v1205
        %v1207 = vpop.f32.mrb[0].mxu0
        %v1208 = vadd.f32 0.0, %v1207
        %1209 = vmatprep.mubr.f32.mxu0 0.0
        %1210 = vmatmul.mubr.f32.gmra.mrb[0].mxu0 %v960
        %v1211 = vpop.f32.mrb[0].mxu0
        %v1212 = vadd.f32 0.0, %v1211
        %v1213 = vpop.f32.mrb[0].mxu0
        %v1214 = vadd.f32 0.0, %v1213
        %1215 = vmatprep.mubr.f32.mxu0 0.0
        %1216 = vmatmul.mubr.f32.gmra.mrb[0].mxu0 %v963
        %v1217 = vpop.f32.mrb[0].mxu0
        %v1218 = vadd.f32 0.0, %v1217
        %v1219 = vpop.f32.mrb[0].mxu0
        %v1220 = vadd.f32 0.0, %v1219
        %1221 = vdwg.mxu0
        %v1222 = vmax.f32 %v1128, %v1130
        %1223 = vmax.xlane.f32.xlu0 %v1222
        %v1224 = vpop.xlane.xlu0 %1223
        %v1225 = vmax.f32 %v1134, %v1136
        %1226 = vmax.xlane.f32.xlu0 %v1225
        %v1227 = vpop.xlane.xlu0 %1226
        %v1228 = vmax.f32 %v1140, %v1142
        %1229 = vmax.xlane.f32.xlu0 %v1228
        %v1230 = vpop.xlane.xlu0 %1229
        %v1231 = vmax.f32 %v1146, %v1148
        %1232 = vmax.xlane.f32.xlu0 %v1231
        %v1233 = vpop.xlane.xlu0 %1232
        %v1234 = vmax.f32 %v1152, %v1154
        %1235 = vmax.xlane.f32.xlu0 %v1234
        %v1236 = vpop.xlane.xlu0 %1235
        %v1237 = vmax.f32 %v1158, %v1160
        %1238 = vmax.xlane.f32.xlu0 %v1237
        %v1239 = vpop.xlane.xlu0 %1238
        %v1240 = vmax.f32 %v1164, %v1166
        %1241 = vmax.xlane.f32.xlu0 %v1240
        %v1242 = vpop.xlane.xlu0 %1241
        %v1243 = vmax.f32 %v1170, %v1172
        %1244 = vmax.xlane.f32.xlu0 %v1243
        %v1245 = vpop.xlane.xlu0 %1244
        %v1246 = vmax.f32 %v1176, %v1178
        %1247 = vmax.xlane.f32.xlu0 %v1246
        %v1248 = vpop.xlane.xlu0 %1247
        %v1249 = vmax.f32 %v1182, %v1184
        %1250 = vmax.xlane.f32.xlu0 %v1249
        %v1251 = vpop.xlane.xlu0 %1250
        %v1252 = vmax.f32 %v1188, %v1190
        %1253 = vmax.xlane.f32.xlu0 %v1252
        %v1254 = vpop.xlane.xlu0 %1253
        %v1255 = vmax.f32 %v1194, %v1196
        %1256 = vmax.xlane.f32.xlu0 %v1255
        %v1257 = vpop.xlane.xlu0 %1256
        %v1258 = vmax.f32 %v1200, %v1202
        %1259 = vmax.xlane.f32.xlu0 %v1258
        %v1260 = vpop.xlane.xlu0 %1259
        %v1261 = vmax.f32 %v1206, %v1208
        %1262 = vmax.xlane.f32.xlu0 %v1261
        %v1263 = vpop.xlane.xlu0 %1262
        %v1264 = vmax.f32 %v1212, %v1214
        %1265 = vmax.xlane.f32.xlu0 %v1264
        %v1266 = vpop.xlane.xlu0 %1265
        %v1267 = vmax.f32 %v1218, %v1220
        %1268 = vmax.xlane.f32.xlu0 %v1267
        %v1269 = vpop.xlane.xlu0 %1268
        %v1270 = vsub.f32 %v1128, %v1224
        %v1271 = vsub.f32 %v1130, %v1224
        %v1272 = vsub.f32 %v1134, %v1227
        %v1273 = vsub.f32 %v1136, %v1227
        %v1274 = vsub.f32 %v1140, %v1230
        %v1275 = vsub.f32 %v1142, %v1230
        %v1276 = vsub.f32 %v1146, %v1233
        %v1277 = vsub.f32 %v1148, %v1233
        %v1278 = vsub.f32 %v1152, %v1236
        %v1279 = vsub.f32 %v1154, %v1236
        %v1280 = vsub.f32 %v1158, %v1239
        %v1281 = vsub.f32 %v1160, %v1239
        %v1282 = vsub.f32 %v1164, %v1242
        %v1283 = vsub.f32 %v1166, %v1242
        %v1284 = vsub.f32 %v1170, %v1245
        %v1285 = vsub.f32 %v1172, %v1245
        %v1286 = vsub.f32 %v1176, %v1248
        %v1287 = vsub.f32 %v1178, %v1248
        %v1288 = vsub.f32 %v1182, %v1251
        %v1289 = vsub.f32 %v1184, %v1251
        %v1290 = vsub.f32 %v1188, %v1254
        %v1291 = vsub.f32 %v1190, %v1254
        %v1292 = vsub.f32 %v1194, %v1257
        %v1293 = vsub.f32 %v1196, %v1257
        %v1294 = vsub.f32 %v1200, %v1260
        %v1295 = vsub.f32 %v1202, %v1260
        %v1296 = vsub.f32 %v1206, %v1263
        %v1297 = vsub.f32 %v1208, %v1263
        %v1298 = vsub.f32 %v1212, %v1266
        %v1299 = vsub.f32 %v1214, %v1266
        %v1300 = vsub.f32 %v1218, %v1269
        %v1301 = vsub.f32 %v1220, %v1269
        %v1302 = vmul.f32 %v1270, 1.442695
        %v1303 = vpow.pop %v1302
        %v1304 = vmul.f32 %v1271, 1.442695
        %v1305 = vpow.pop %v1304
        %v1306 = vmul.f32 %v1272, 1.442695
        %v1307 = vpow.pop %v1306
        %v1308 = vmul.f32 %v1273, 1.442695
        %v1309 = vpow.pop %v1308
        %v1310 = vmul.f32 %v1274, 1.442695
        %v1311 = vpow.pop %v1310
        %v1312 = vmul.f32 %v1275, 1.442695
        %v1313 = vpow.pop %v1312
        %v1314 = vmul.f32 %v1276, 1.442695
        %v1315 = vpow.pop %v1314
        %v1316 = vmul.f32 %v1277, 1.442695
        %v1317 = vpow.pop %v1316
        %v1318 = vmul.f32 %v1278, 1.442695
        %v1319 = vpow.pop %v1318
        %v1320 = vmul.f32 %v1279, 1.442695
        %v1321 = vpow.pop %v1320
        %v1322 = vmul.f32 %v1280, 1.442695
        %v1323 = vpow.pop %v1322
        %v1324 = vmul.f32 %v1281, 1.442695
        %v1325 = vpow.pop %v1324
        %v1326 = vmul.f32 %v1282, 1.442695
        %v1327 = vpow.pop %v1326
        %v1328 = vmul.f32 %v1283, 1.442695
        %v1329 = vpow.pop %v1328
        %v1330 = vmul.f32 %v1284, 1.442695
        %v1331 = vpow.pop %v1330
        %v1332 = vmul.f32 %v1285, 1.442695
        %v1333 = vpow.pop %v1332
        %v1334 = vmul.f32 %v1286, 1.442695
        %v1335 = vpow.pop %v1334
        %v1336 = vmul.f32 %v1287, 1.442695
        %v1337 = vpow.pop %v1336
        %v1338 = vmul.f32 %v1288, 1.442695
        %v1339 = vpow.pop %v1338
        %v1340 = vmul.f32 %v1289, 1.442695
        %v1341 = vpow.pop %v1340
        %v1342 = vmul.f32 %v1290, 1.442695
        %v1343 = vpow.pop %v1342
        %v1344 = vmul.f32 %v1291, 1.442695
        %v1345 = vpow.pop %v1344
        %v1346 = vmul.f32 %v1292, 1.442695
        %v1347 = vpow.pop %v1346
        %v1348 = vmul.f32 %v1293, 1.442695
        %v1349 = vpow.pop %v1348
        %v1350 = vmul.f32 %v1294, 1.442695
        %v1351 = vpow.pop %v1350
        %v1352 = vmul.f32 %v1295, 1.442695
        %v1353 = vpow.pop %v1352
        %v1354 = vmul.f32 %v1296, 1.442695
        %v1355 = vpow.pop %v1354
        %v1356 = vmul.f32 %v1297, 1.442695
        %v1357 = vpow.pop %v1356
        %v1358 = vmul.f32 %v1298, 1.442695
        %v1359 = vpow.pop %v1358
        %v1360 = vmul.f32 %v1299, 1.442695
        %v1361 = vpow.pop %v1360
        %v1362 = vmul.f32 %v1300, 1.442695
        %v1363 = vpow.pop %v1362
        %v1364 = vmul.f32 %v1301, 1.442695
        %v1365 = vpow.pop %v1364
        %v1366 = vadd.f32 %v1303, %v1305
        %1367 = vadd.xlane.f32.xlu0 %v1366
        %v1368 = vpop.xlane.xlu0 %1367
        %v1369 = vadd.f32 %v1307, %v1309
        %1370 = vadd.xlane.f32.xlu0 %v1369
        %v1371 = vpop.xlane.xlu0 %1370
        %v1372 = vadd.f32 %v1311, %v1313
        %1373 = vadd.xlane.f32.xlu0 %v1372
        %v1374 = vpop.xlane.xlu0 %1373
        %v1375 = vadd.f32 %v1315, %v1317
        %1376 = vadd.xlane.f32.xlu0 %v1375
        %v1377 = vpop.xlane.xlu0 %1376
        %v1378 = vadd.f32 %v1319, %v1321
        %1379 = vadd.xlane.f32.xlu0 %v1378
        %v1380 = vpop.xlane.xlu0 %1379
        %v1381 = vadd.f32 %v1323, %v1325
        %1382 = vadd.xlane.f32.xlu0 %v1381
        %v1383 = vpop.xlane.xlu0 %1382
        %v1384 = vadd.f32 %v1327, %v1329
        %1385 = vadd.xlane.f32.xlu0 %v1384
        %v1386 = vpop.xlane.xlu0 %1385
        %v1387 = vadd.f32 %v1331, %v1333
        %1388 = vadd.xlane.f32.xlu0 %v1387
        %v1389 = vpop.xlane.xlu0 %1388
        %v1390 = vadd.f32 %v1335, %v1337
        %1391 = vadd.xlane.f32.xlu0 %v1390
        %v1392 = vpop.xlane.xlu0 %1391
        %v1393 = vadd.f32 %v1339, %v1341
        %1394 = vadd.xlane.f32.xlu0 %v1393
        %v1395 = vpop.xlane.xlu0 %1394
        %v1396 = vadd.f32 %v1343, %v1345
        %1397 = vadd.xlane.f32.xlu0 %v1396
        %v1398 = vpop.xlane.xlu0 %1397
        %v1399 = vadd.f32 %v1347, %v1349
        %1400 = vadd.xlane.f32.xlu0 %v1399
        %v1401 = vpop.xlane.xlu0 %1400
        %v1402 = vadd.f32 %v1351, %v1353
        %1403 = vadd.xlane.f32.xlu0 %v1402
        %v1404 = vpop.xlane.xlu0 %1403
        %v1405 = vadd.f32 %v1355, %v1357
        %1406 = vadd.xlane.f32.xlu0 %v1405
        %v1407 = vpop.xlane.xlu0 %1406
        %v1408 = vadd.f32 %v1359, %v1361
        %1409 = vadd.xlane.f32.xlu0 %v1408
        %v1410 = vpop.xlane.xlu0 %1409
        %v1411 = vadd.f32 %v1363, %v1365
        %1412 = vadd.xlane.f32.xlu0 %v1411
        %v1413 = vpop.xlane.xlu0 %1412
        %v1414 = vrcp.pop %v1368
        %v1415 = vrcp.pop %v1371
        %v1416 = vrcp.pop %v1374
        %v1417 = vrcp.pop %v1377
        %v1418 = vrcp.pop %v1380
        %v1419 = vrcp.pop %v1383
        %v1420 = vrcp.pop %v1386
        %v1421 = vrcp.pop %v1389
        %v1422 = vrcp.pop %v1392
        %v1423 = vrcp.pop %v1395
        %v1424 = vrcp.pop %v1398
        %v1425 = vrcp.pop %v1401
        %v1426 = vrcp.pop %v1404
        %v1427 = vrcp.pop %v1407
        %v1428 = vrcp.pop %v1410
        %v1429 = vrcp.pop %v1413
        %v1430 = vmul.f32 %v1303, %v1414
        %v1431 = vmul.f32 %v1305, %v1414
        %v1432 = vmul.f32 %v1307, %v1415
        %v1433 = vmul.f32 %v1309, %v1415
        %v1434 = vmul.f32 %v1311, %v1416
        %v1435 = vmul.f32 %v1313, %v1416
        %v1436 = vmul.f32 %v1315, %v1417
        %v1437 = vmul.f32 %v1317, %v1417
        %v1438 = vmul.f32 %v1319, %v1418
        %v1439 = vmul.f32 %v1321, %v1418
        %v1440 = vmul.f32 %v1323, %v1419
        %v1441 = vmul.f32 %v1325, %v1419
        %v1442 = vmul.f32 %v1327, %v1420
        %v1443 = vmul.f32 %v1329, %v1420
        %v1444 = vmul.f32 %v1331, %v1421
        %v1445 = vmul.f32 %v1333, %v1421
        %v1446 = vmul.f32 %v1335, %v1422
        %v1447 = vmul.f32 %v1337, %v1422
        %v1448 = vmul.f32 %v1339, %v1423
        %v1449 = vmul.f32 %v1341, %v1423
        %v1450 = vmul.f32 %v1343, %v1424
        %v1451 = vmul.f32 %v1345, %v1424
        %v1452 = vmul.f32 %v1347, %v1425
        %v1453 = vmul.f32 %v1349, %v1425
        %v1454 = vmul.f32 %v1351, %v1426
        %v1455 = vmul.f32 %v1353, %v1426
        %v1456 = vmul.f32 %v1355, %v1427
        %v1457 = vmul.f32 %v1357, %v1427
        %v1458 = vmul.f32 %v1359, %v1428
        %v1459 = vmul.f32 %v1361, %v1428
        %v1460 = vmul.f32 %v1363, %v1429
        %v1461 = vmul.f32 %v1365, %v1429
        %v1462 = vld [vmem:[#allocation4] sm:$0xff]
        %v1463 = vld [vmem:[#allocation4 + $0x8] sm:$0xff]
        %v1464 = vld [vmem:[#allocation4 + $0x10] sm:$0xff]
        %v1465 = vld [vmem:[#allocation4 + $0x18] sm:$0xff]
        %v1466 = vld [vmem:[#allocation4 + $0x20] sm:$0xff]
        %v1467 = vld [vmem:[#allocation4 + $0x28] sm:$0xff]
        %v1468 = vld [vmem:[#allocation4 + $0x30] sm:$0xff]
        %v1469 = vld [vmem:[#allocation4 + $0x38] sm:$0xff]
        %v1470 = vld [vmem:[#allocation4 + $0x40] sm:$0xff]
        %v1471 = vld [vmem:[#allocation4 + $0x48] sm:$0xff]
        %v1472 = vld [vmem:[#allocation4 + $0x50] sm:$0xff]
        %v1473 = vld [vmem:[#allocation4 + $0x58] sm:$0xff]
        %v1474 = vld [vmem:[#allocation4 + $0x60] sm:$0xff]
        %v1475 = vld [vmem:[#allocation4 + $0x68] sm:$0xff]
        %v1476 = vld [vmem:[#allocation4 + $0x70] sm:$0xff]
        %v1477 = vld [vmem:[#allocation4 + $0x78] sm:$0xff]
        %v1478 = vld [vmem:[#allocation4 + $0x80] sm:$0xff]
        %v1479 = vld [vmem:[#allocation4 + $0x88] sm:$0xff]
        %v1480 = vld [vmem:[#allocation4 + $0x90] sm:$0xff]
        %v1481 = vld [vmem:[#allocation4 + $0x98] sm:$0xff]
        %v1482 = vld [vmem:[#allocation4 + $0xa0] sm:$0xff]
        %v1483 = vld [vmem:[#allocation4 + $0xa8] sm:$0xff]
        %v1484 = vld [vmem:[#allocation4 + $0xb0] sm:$0xff]
        %v1485 = vld [vmem:[#allocation4 + $0xb8] sm:$0xff]
        %v1486 = vld [vmem:[#allocation4 + $0xc0] sm:$0xff]
        %v1487 = vld [vmem:[#allocation4 + $0xc8] sm:$0xff]
        %v1488 = vld [vmem:[#allocation4 + $0xd0] sm:$0xff]
        %v1489 = vld [vmem:[#allocation4 + $0xd8] sm:$0xff]
        %v1490 = vld [vmem:[#allocation4 + $0xe0] sm:$0xff]
        %v1491 = vld [vmem:[#allocation4 + $0xe8] sm:$0xff]
        %v1492 = vld [vmem:[#allocation4 + $0xf0] sm:$0xff]
        %v1493 = vld [vmem:[#allocation4 + $0xf8] sm:$0xff]
        %1494 = vmatprep.subr.mxu0 0.0
        %1495 = vmatpush1.msra.mxu0 %v1462
        %1496 = vmatprep.subr.mxu0 0.0
        %1497 = vmatpush1.msra.mxu0 %v1463
        %1498 = vmatprep.subr.mxu0 0.0
        %1499 = vmatpush1.msra.mxu0 %v1464
        %1500 = vmatprep.subr.mxu0 0.0
        %1501 = vmatpush1.msra.mxu0 %v1465
        %1502 = vmatprep.subr.mxu0 0.0
        %1503 = vmatpush1.msra.mxu0 %v1466
        %1504 = vmatprep.subr.mxu0 0.0
        %1505 = vmatpush1.msra.mxu0 %v1467
        %1506 = vmatprep.subr.mxu0 0.0
        %1507 = vmatpush1.msra.mxu0 %v1468
        %1508 = vmatprep.subr.mxu0 0.0
        %1509 = vmatpush1.msra.mxu0 %v1469
        %1510 = vmatprep.subr.mxu0 0.0
        %1511 = vmatpush1.msra.mxu0 %v1470
        %1512 = vmatprep.subr.mxu0 0.0
        %1513 = vmatpush1.msra.mxu0 %v1471
        %1514 = vmatprep.subr.mxu0 0.0
        %1515 = vmatpush1.msra.mxu0 %v1472
        %1516 = vmatprep.subr.mxu0 0.0
        %1517 = vmatpush1.msra.mxu0 %v1473
        %1518 = vmatprep.subr.mxu0 0.0
        %1519 = vmatpush1.msra.mxu0 %v1474
        %1520 = vmatprep.subr.mxu0 0.0
        %1521 = vmatpush1.msra.mxu0 %v1475
        %1522 = vmatprep.subr.mxu0 0.0
        %1523 = vmatpush1.msra.mxu0 %v1476
        %1524 = vmatprep.subr.mxu0 0.0
        %1525 = vmatpush1.msra.mxu0 %v1477
        %1526 = vmatprep.subr.mxu0 0.0
        %1527 = vmatpush1.msra.mxu0 %v1478
        %1528 = vmatprep.subr.mxu0 0.0
        %1529 = vmatpush1.msra.mxu0 %v1479
        %1530 = vmatprep.subr.mxu0 0.0
        %1531 = vmatpush1.msra.mxu0 %v1480
        %1532 = vmatprep.subr.mxu0 0.0
        %1533 = vmatpush1.msra.mxu0 %v1481
        %1534 = vmatprep.subr.mxu0 0.0
        %1535 = vmatpush1.msra.mxu0 %v1482
        %1536 = vmatprep.subr.mxu0 0.0
        %1537 = vmatpush1.msra.mxu0 %v1483
        %1538 = vmatprep.subr.mxu0 0.0
        %1539 = vmatpush1.msra.mxu0 %v1484
        %1540 = vmatprep.subr.mxu0 0.0
        %1541 = vmatpush1.msra.mxu0 %v1485
        %1542 = vmatprep.subr.mxu0 0.0
        %1543 = vmatpush1.msra.mxu0 %v1486
        %1544 = vmatprep.subr.mxu0 0.0
        %1545 = vmatpush1.msra.mxu0 %v1487
        %1546 = vmatprep.subr.mxu0 0.0
        %1547 = vmatpush1.msra.mxu0 %v1488
        %1548 = vmatprep.subr.mxu0 0.0
        %1549 = vmatpush1.msra.mxu0 %v1489
        %1550 = vmatprep.subr.mxu0 0.0
        %1551 = vmatpush1.msra.mxu0 %v1490
        %1552 = vmatprep.subr.mxu0 0.0
        %1553 = vmatpush1.msra.mxu0 %v1491
        %1554 = vmatprep.subr.mxu0 0.0
        %1555 = vmatpush1.msra.mxu0 %v1492
        %1556 = vmatprep.subr.mxu0 0.0
        %1557 = vmatpush1.msra.mxu0 %v1493
        %1558 = vmatprep.mubr.f32.mxu0 %v1431
        %1559 = vmatmul.mubr.f32.gmra.mrb[0].mxu0 %v1430
        %v1560 = vpop.f32.mrb[0].mxu0
        %v1561 = vadd.f32 0.0, %v1560
        %v1562 = vpop.f32.mrb[0].mxu0
        %1563 = vmatprep.mubr.f32.mxu0 %v1433
        %1564 = vmatmul.mubr.f32.gmra.mrb[0].mxu0 %v1432
        %v1565 = vpop.f32.mrb[0].mxu0
        %v1566 = vadd.f32 0.0, %v1565
        %v1567 = vpop.f32.mrb[0].mxu0
        %1568 = vmatprep.mubr.f32.mxu0 %v1435
        %1569 = vmatmul.mubr.f32.gmra.mrb[0].mxu0 %v1434
        %v1570 = vpop.f32.mrb[0].mxu0
        %v1571 = vadd.f32 0.0, %v1570
        %v1572 = vpop.f32.mrb[0].mxu0
        %1573 = vmatprep.mubr.f32.mxu0 %v1437
        %1574 = vmatmul.mubr.f32.gmra.mrb[0].mxu0 %v1436
        %v1575 = vpop.f32.mrb[0].mxu0
        %v1576 = vadd.f32 0.0, %v1575
        %v1577 = vpop.f32.mrb[0].mxu0
        %1578 = vmatprep.mubr.f32.mxu0 %v1439
        %1579 = vmatmul.mubr.f32.gmra.mrb[0].mxu0 %v1438
        %v1580 = vpop.f32.mrb[0].mxu0
        %v1581 = vadd.f32 0.0, %v1580
        %v1582 = vpop.f32.mrb[0].mxu0
        %1583 = vmatprep.mubr.f32.mxu0 %v1441
        %1584 = vmatmul.mubr.f32.gmra.mrb[0].mxu0 %v1440
        %v1585 = vpop.f32.mrb[0].mxu0
        %v1586 = vadd.f32 0.0, %v1585
        %v1587 = vpop.f32.mrb[0].mxu0
        %1588 = vmatprep.mubr.f32.mxu0 %v1443
        %1589 = vmatmul.mubr.f32.gmra.mrb[0].mxu0 %v1442
        %v1590 = vpop.f32.mrb[0].mxu0
        %v1591 = vadd.f32 0.0, %v1590
        %v1592 = vpop.f32.mrb[0].mxu0
        %1593 = vmatprep.mubr.f32.mxu0 %v1445
        %1594 = vmatmul.mubr.f32.gmra.mrb[0].mxu0 %v1444
        %v1595 = vpop.f32.mrb[0].mxu0
        %v1596 = vadd.f32 0.0, %v1595
        %v1597 = vpop.f32.mrb[0].mxu0
        %1598 = vmatprep.mubr.f32.mxu0 %v1447
        %1599 = vmatmul.mubr.f32.gmra.mrb[0].mxu0 %v1446
        %v1600 = vpop.f32.mrb[0].mxu0
        %v1601 = vadd.f32 0.0, %v1600
        %v1602 = vpop.f32.mrb[0].mxu0
        %1603 = vmatprep.mubr.f32.mxu0 %v1449
        %1604 = vmatmul.mubr.f32.gmra.mrb[0].mxu0 %v1448
        %v1605 = vpop.f32.mrb[0].mxu0
        %v1606 = vadd.f32 0.0, %v1605
        %v1607 = vpop.f32.mrb[0].mxu0
        %1608 = vmatprep.mubr.f32.mxu0 %v1451
        %1609 = vmatmul.mubr.f32.gmra.mrb[0].mxu0 %v1450
        %v1610 = vpop.f32.mrb[0].mxu0
        %v1611 = vadd.f32 0.0, %v1610
        %v1612 = vpop.f32.mrb[0].mxu0
        %1613 = vmatprep.mubr.f32.mxu0 %v1453
        %1614 = vmatmul.mubr.f32.gmra.mrb[0].mxu0 %v1452
        %v1615 = vpop.f32.mrb[0].mxu0
        %v1616 = vadd.f32 0.0, %v1615
        %v1617 = vpop.f32.mrb[0].mxu0
        %1618 = vmatprep.mubr.f32.mxu0 %v1455
        %1619 = vmatmul.mubr.f32.gmra.mrb[0].mxu0 %v1454
        %v1620 = vpop.f32.mrb[0].mxu0
        %v1621 = vadd.f32 0.0, %v1620
        %v1622 = vpop.f32.mrb[0].mxu0
        %1623 = vmatprep.mubr.f32.mxu0 %v1457
        %1624 = vmatmul.mubr.f32.gmra.mrb[0].mxu0 %v1456
        %v1625 = vpop.f32.mrb[0].mxu0
        %v1626 = vadd.f32 0.0, %v1625
        %v1627 = vpop.f32.mrb[0].mxu0
        %1628 = vmatprep.mubr.f32.mxu0 %v1459
        %1629 = vmatmul.mubr.f32.gmra.mrb[0].mxu0 %v1458
        %v1630 = vpop.f32.mrb[0].mxu0
        %v1631 = vadd.f32 0.0, %v1630
        %v1632 = vpop.f32.mrb[0].mxu0
        %1633 = vmatprep.mubr.f32.mxu0 %v1461
        %1634 = vmatmul.mubr.f32.gmra.mrb[0].mxu0 %v1460
        %v1635 = vpop.f32.mrb[0].mxu0
        %v1636 = vadd.f32 0.0, %v1635
        %v1637 = vpop.f32.mrb[0].mxu0
        %1638 = vdwg.mxu0
        %s1639 = sld [smem:[#allocation5]]
        %v1640 = vstv %s1639
        %v1641 = vmul.f32 %v1640, %v1561
        %v1642 = vmul.f32 %v1640, %v1566
        %v1643 = vmul.f32 %v1640, %v1571
        %v1644 = vmul.f32 %v1640, %v1576
        %v1645 = vmul.f32 %v1640, %v1581
        %v1646 = vmul.f32 %v1640, %v1586
        %v1647 = vmul.f32 %v1640, %v1591
        %v1648 = vmul.f32 %v1640, %v1596
        %v1649 = vmul.f32 %v1640, %v1601
        %v1650 = vmul.f32 %v1640, %v1606
        %v1651 = vmul.f32 %v1640, %v1611
        %v1652 = vmul.f32 %v1640, %v1616
        %v1653 = vmul.f32 %v1640, %v1621
        %v1654 = vmul.f32 %v1640, %v1626
        %v1655 = vmul.f32 %v1640, %v1631
        %v1656 = vmul.f32 %v1640, %v1636
        %v1657 = vld [vmem:[%s270] sm:$0xff]
        %v1658 = vld [vmem:[%s270 + $0x8] sm:$0xff]
        %v1659 = vld [vmem:[%s270 + $0x10] sm:$0xff]
        %v1660 = vld [vmem:[%s270 + $0x18] sm:$0xff]
        %v1661 = vld [vmem:[%s270 + $0x20] sm:$0xff]
        %v1662 = vld [vmem:[%s270 + $0x28] sm:$0xff]
        %v1663 = vld [vmem:[%s270 + $0x30] sm:$0xff]
        %v1664 = vld [vmem:[%s270 + $0x38] sm:$0xff]
        %v1665 = vld [vmem:[%s270 + $0x40] sm:$0xff]
        %v1666 = vld [vmem:[%s270 + $0x48] sm:$0xff]
        %v1667 = vld [vmem:[%s270 + $0x50] sm:$0xff]
        %v1668 = vld [vmem:[%s270 + $0x58] sm:$0xff]
        %v1669 = vld [vmem:[%s270 + $0x60] sm:$0xff]
        %v1670 = vld [vmem:[%s270 + $0x68] sm:$0xff]
        %v1671 = vld [vmem:[%s270 + $0x70] sm:$0xff]
        %v1672 = vld [vmem:[%s270 + $0x78] sm:$0xff]
        %v1673 = vadd.f32 %v1641, %v1657
        %v1674 = vadd.f32 %v1642, %v1658
        %v1675 = vadd.f32 %v1643, %v1659
        %v1676 = vadd.f32 %v1644, %v1660
        %v1677 = vadd.f32 %v1645, %v1661
        %v1678 = vadd.f32 %v1646, %v1662
        %v1679 = vadd.f32 %v1647, %v1663
        %v1680 = vadd.f32 %v1648, %v1664
        %v1681 = vadd.f32 %v1649, %v1665
        %v1682 = vadd.f32 %v1650, %v1666
        %v1683 = vadd.f32 %v1651, %v1667
        %v1684 = vadd.f32 %v1652, %v1668
        %v1685 = vadd.f32 %v1653, %v1669
        %v1686 = vadd.f32 %v1654, %v1670
        %v1687 = vadd.f32 %v1655, %v1671
        %v1688 = vadd.f32 %v1656, %v1672
        %1689 = vst [vmem:[%s301] sm:$0xff] %v1673
        %1690 = vst [vmem:[%s301 + $0x8] sm:$0xff] %v1674
        %1691 = vst [vmem:[%s301 + $0x10] sm:$0xff] %v1675
        %1692 = vst [vmem:[%s301 + $0x18] sm:$0xff] %v1676
        %1693 = vst [vmem:[%s301 + $0x20] sm:$0xff] %v1677
        %1694 = vst [vmem:[%s301 + $0x28] sm:$0xff] %v1678
        %1695 = vst [vmem:[%s301 + $0x30] sm:$0xff] %v1679
        %1696 = vst [vmem:[%s301 + $0x38] sm:$0xff] %v1680
        %1697 = vst [vmem:[%s301 + $0x40] sm:$0xff] %v1681
        %1698 = vst [vmem:[%s301 + $0x48] sm:$0xff] %v1682
        %1699 = vst [vmem:[%s301 + $0x50] sm:$0xff] %v1683
        %1700 = vst [vmem:[%s301 + $0x58] sm:$0xff] %v1684
        %1701 = vst [vmem:[%s301 + $0x60] sm:$0xff] %v1685
        %1702 = vst [vmem:[%s301 + $0x68] sm:$0xff] %v1686
        %1703 = vst [vmem:[%s301 + $0x70] sm:$0xff] %v1687
        %1704 = vst [vmem:[%s301 + $0x78] sm:$0xff] %v1688
        %s1705 = sand.u32 %s165, 1
        %s1706 = scalar_lea.sflag [#allocation8], %s1705
        %s1707 = sand.u32 %s165, 1
        %s1708 = smul.addr %s1707, 128
        %s1709 = scalar_lea.vmem [#allocation11], %s1708
        // Predicated region
        $region53: #{tpu_custom_call.1} parent=39 // pred_check
          %p1710 = pneg %p175
        $region54: #{tpu_custom_call.1} parent=39 // pred_check_branch
          %1712 = sbr.rel (%p1710) target = $region56
        $region55: #{tpu_custom_call.1} parent=39 // pred_region
          %s1713 = smul.u32 16, %s31
          %s1715 = ssub.s32 2048, 2048
          %1716 = vsyncadd %s1706, %s1715
          %s1717 = smul.addr %s30, 32
          %s1718 = sadd.s32 %s1713, %s1717
          %s1719 = smul.addr %s1718, 128
          %s1720 = scalar_lea.hbm %s5, %s1719
          %s1721 = sshll.u32 %s1709, 4
          %s1722 = int_to_ptr.vmem [resolvable:$true] %s1721
          %1727 = dma.vmem_to_hbm [thread:$0]  %s1722, 2048, %s1720, %s1706, 128, 128, 8
        $region56: #{tpu_custom_call.1} parent=39 // pred_fallthru
          _
      $region40: #{tpu_custom_call.1} parent=5 // pred_fallthru
        _
      %p1728 = scmp.le.s32.totalorder 2, %s21
      // Predicated region
      $region57: #{tpu_custom_call.1} parent=5 // pred_check
        %p1729 = pneg %p1728
      $region58: #{tpu_custom_call.1} parent=5 // pred_check_branch
        %1731 = sbr.rel (%p1729) target = $region60
      $region59: #{tpu_custom_call.1} parent=5 // pred_region
        %s1732 = ssub.s32 %s21, 2
        // Predicated region
        $region61: #{tpu_custom_call.1} parent=59 // pred_check
          %p1733 = pneg %p181
        $region62: #{tpu_custom_call.1} parent=59 // pred_check_branch
          %1735 = sbr.rel (%p1733) target = $region64
        $region63: #{tpu_custom_call.1} parent=59 // pred_region
          %s1736 = sand.u32 %s166, 1
          %s1737 = scalar_lea.sflag [#allocation8], %s1736
          %s1738 = sand.u32 %s166, 1
          %s1739 = smul.addr %s1738, 128
          %s1740 = scalar_lea.vmem [#allocation11], %s1739
          %1741 = dma.done %s1737, 2048
        $region64: #{tpu_custom_call.1} parent=59 // pred_fallthru
          _
      $region60: #{tpu_custom_call.1} parent=5 // pred_fallthru
        _
    $region6: #{tpu_custom_call.1} parent=1 // loop_footer
      %s25 = sadd.s32 1, %s21
    $region7: #{tpu_custom_call.1} parent=1 // loop_footer_branch
      %20 = sbr.rel target = $region3
    $region8: #{tpu_custom_call.1} parent=1 // loop_exit
      _
    %1742 = vsyncpa [#allocation7], 1
    %s1743 = scalar_lea.sflag [#allocation7], 1
    %1744 = vsyncpa %s1743, 1
    %1745 = vsyncpa [#allocation10], 1
    %s1746 = scalar_lea.sflag [#allocation10], 1
    %1747 = vsyncpa %s1746, 1
    %1748 = vsyncpa [#allocation8], 1
    %s1749 = scalar_lea.sflag [#allocation8], 1
    %1750 = vsyncpa %s1749, 1

</llo_original>
